<compile_context>
chip_gen: v7x
topology: tpu7x:2x2x1
jax: 0.10.0
libtpu: 0.0.40
codegen_flags: <defaults>
</compile_context>

<pallas_src>
import functools

import jax
import jax.numpy as jnp
from jax.experimental import pallas as pl
from jax.experimental.pallas import tpu as pltpu

# ---- configuration (small, consistent with the module's structure) ----
B = 2                 # batch
CIN = 3               # image channels
H = W = 64            # image spatial size
C_BASE = 64           # stands in for the 1024-ch "dout_base_model" features
C_TOP = 128           # stands in for the 2048-ch RCNN_top output
EMB = 32              # embedding_dim
P = 4                 # cfg.POOLING_SIZE (scaled down)
STRIDE = 16           # feature stride (1/16 spatial scale)
R_PER_IM = 4          # rois per image (RPN replaced by fixed proposals)
GALLERY = 8           # number of gallery (one-shot) classes
THRESHOLD = 1.0

HF = H // STRIDE      # 4
WF = W // STRIDE      # 4
S = P * P             # 16 spatial samples per ROI

PIXEL_MEANS = jnp.array([102.9801, 115.9465, 122.7717], jnp.float32)  # cfg.PIXEL_MEANS
IMG_MEAN = jnp.array([0.485, 0.456, 0.406], jnp.float32)
IMG_STD = jnp.array([0.229, 0.224, 0.225], jnp.float32)


# ---------------------------------------------------------------------------
# Pallas kernels
# ---------------------------------------------------------------------------
def backbone_kernel(x_ref, wdet_ref, wos_ref, bos_ref, fdet_ref, fos_ref):
    # x: (rows_tile, 3) strided pixel rows.  Both 1x1-conv branches are done as
    # three VPU FMAs each (K=3 would leave the MXU <3% utilized); the one-shot
    # branch carries the folded pixel-normalization bias.
    x = x_ref[...]
    wd = wdet_ref[...]                                   # (3, C_BASE)
    wo = wos_ref[...]                                    # (3, C_BASE), diag(a)-scaled
    det = (x[:, 0:1] * wd[0:1, :]
           + x[:, 1:2] * wd[1:2, :]
           + x[:, 2:3] * wd[2:3, :])
    osf = (x[:, 0:1] * wo[0:1, :]
           + x[:, 1:2] * wo[1:2, :]
           + x[:, 2:3] * wo[2:3, :]) + bos_ref[...]      # + b @ W_os
    fdet_ref[...] = jnp.maximum(det, 0.0)
    fos_ref[...] = jnp.maximum(osf, 0.0)


def tail_kernel(pm_ref, pdet_ref, pos_ref, wtd_ref, wto_ref,
                wbb_ref, bbb_ref, wemb_ref, bemb_ref, gT_ref, g2_ref,
                bbox_ref, lab_ref, nbg_ref, *, threshold_sq):
    # Fused tail over ALL ROIs in one step:
    #   per-ROI spatial mean (as a pooling-matrix matmul) -> layer4 stand-in matmul
    #   -> bbox linear (det) / embedding linear + squared-distance min (one-shot).
    # mean-before-matmul is exact because the layer4 stand-in is linear (no ReLU).
    pm = pm_ref[...]                                                    # (R, R*S)
    fdet = jnp.dot(pm, pdet_ref[...], preferred_element_type=jnp.float32)   # (R, C_BASE)
    fos = jnp.dot(pm, pos_ref[...], preferred_element_type=jnp.float32)     # (R, C_BASE)

    fc7_det = jnp.dot(fdet, wtd_ref[...], preferred_element_type=jnp.float32)  # (R, C_TOP)
    fc7_os = jnp.dot(fos, wto_ref[...], preferred_element_type=jnp.float32)    # (R, C_TOP)

    bbox_ref[...] = (jnp.dot(fc7_det, wbb_ref[...],
                             preferred_element_type=jnp.float32) + bbb_ref[...])

    emb = (jnp.dot(fc7_os, wemb_ref[...],
                   preferred_element_type=jnp.float32) + bemb_ref[...])     # (R, EMB)

    # squared Euclidean distances: ||a||^2 - 2 a.b + ||b||^2  (no sqrt needed)
    a2 = jnp.sum(emb * emb, axis=1, keepdims=True)                          # (R, 1)
    ab = jnp.dot(emb, gT_ref[...], preferred_element_type=jnp.float32)      # (R, G)
    d2 = jnp.maximum(a2 - 2.0 * ab + g2_ref[...], 0.0)
    min_d2 = jnp.min(d2, axis=1, keepdims=True)
    g = d2.shape[1]
    idx = jax.lax.broadcasted_iota(jnp.int32, d2.shape, 1)
    # first index attaining the min (matches torch.min tie-break; argmin of d2 == argmin of d)
    lab_ref[...] = jnp.min(jnp.where(d2 <= min_d2, idx, g), axis=1, keepdims=True)
    nbg_ref[...] = (min_d2 <= threshold_sq).astype(jnp.int32)


# ---------------------------------------------------------------------------
# Pallas wrappers
# ---------------------------------------------------------------------------
def pallas_backbone(x_rows, w_det, w_os_folded, b_os_folded):
    rows, cin = x_rows.shape
    rows_per_im = rows // B
    cb = w_det.shape[1]
    return pl.pallas_call(
        backbone_kernel,
        out_shape=(
            jax.ShapeDtypeStruct((rows, cb), jnp.float32),
            jax.ShapeDtypeStruct((rows, cb), jnp.float32),
        ),
        grid=(B,),
        in_specs=[
            pl.BlockSpec((rows_per_im, cin), lambda i: (i, 0)),
            pl.BlockSpec((cin, cb), lambda i: (0, 0)),
            pl.BlockSpec((cin, cb), lambda i: (0, 0)),
            pl.BlockSpec((1, cb), lambda i: (0, 0)),
        ],
        out_specs=(
            pl.BlockSpec((rows_per_im, cb), lambda i: (i, 0)),
            pl.BlockSpec((rows_per_im, cb), lambda i: (i, 0)),
        ),
        compiler_params=pltpu.CompilerParams(dimension_semantics=("parallel",)),
    )(x_rows, w_det, w_os_folded, b_os_folded)


def pallas_tail(pool_mat, p_det2d, p_os2d, w_top_det, w_top_os,
                w_bbox, b_bbox, w_emb, b_emb, gallery, threshold):
    r = pool_mat.shape[0]
    gT = gallery.T                                     # (EMB, G) glue precompute
    g2 = jnp.sum(gallery * gallery, axis=1)[None, :]   # (1, G)
    kern = functools.partial(tail_kernel, threshold_sq=float(threshold) ** 2)
    bbox, lab, nbg = pl.pallas_call(
        kern,
        out_shape=(
            jax.ShapeDtypeStruct((r, w_bbox.shape[1]), jnp.float32),
            jax.ShapeDtypeStruct((r, 1), jnp.int32),
            jax.ShapeDtypeStruct((r, 1), jnp.int32),
        ),
    )(pool_mat, p_det2d, p_os2d, w_top_det, w_top_os,
      w_bbox, b_bbox, w_emb, b_emb, gT, g2)
    return bbox, lab[:, 0], nbg[:, 0].astype(bool)


# ---------------------------------------------------------------------------
# plain-JAX glue
# ---------------------------------------------------------------------------
def roi_pool_nearest_nhwc(feat, rois_flat, pool_size, spatial_scale):
    # TODO(synk): nearest-neighbor sampling approximates RoIAlign bilinear pooling.
    _, hf, wf, _ = feat.shape
    bidx = rois_flat[:, 0].astype(jnp.int32)
    x1, y1, x2, y2 = (rois_flat[:, i] * spatial_scale for i in range(1, 5))
    t = (jnp.arange(pool_size, dtype=jnp.float32) + 0.5) / pool_size
    ys = y1[:, None] + t[None, :] * (y2 - y1)[:, None]                 # (R, P)
    xs = x1[:, None] + t[None, :] * (x2 - x1)[:, None]                 # (R, P)
    yi = jnp.clip(jnp.floor(ys).astype(jnp.int32), 0, hf - 1)
    xi = jnp.clip(jnp.floor(xs).astype(jnp.int32), 0, wf - 1)

    def one(b, yr, xr):
        f = feat[b]                                                    # (Hf, Wf, C)
        return f[yr[:, None], xr[None, :], :]                          # (P, P, C)

    return jax.vmap(one)(bidx, yi, xi)                                 # (R, P, P, C)


def make_params(key):
    ks = jax.random.split(key, 7)
    return {
        "w_base_det": 0.10 * jax.random.normal(ks[0], (CIN, C_BASE), jnp.float32),
        "w_top_det": 0.05 * jax.random.normal(ks[1], (C_BASE, C_TOP), jnp.float32),
        "w_bbox": 0.05 * jax.random.normal(ks[2], (C_TOP, 4), jnp.float32),
        "b_bbox": jnp.zeros((1, 4), jnp.float32),
        "w_base_os": 0.10 * jax.random.normal(ks[3], (CIN, C_BASE), jnp.float32),
        "w_top_os": 0.05 * jax.random.normal(ks[4], (C_BASE, C_TOP), jnp.float32),
        "w_emb": 0.05 * jax.random.normal(ks[5], (C_TOP, EMB), jnp.float32),
        "b_emb": jnp.zeros((1, EMB), jnp.float32),
        "embeddings_obj": jax.random.normal(ks[6], (GALLERY, EMB), jnp.float32),
    }


def forward(params, im_data, im_info, gt_boxes, num_boxes):
    del im_info, gt_boxes, num_boxes  # consumed only by the (untranslated) RPN
    b = im_data.shape[0]

    # TODO(synk): RPN proposal generation not translated; deterministic proposals instead.
    boxes = jnp.array(
        [[0.0, 0.0, 63.0, 63.0],
         [0.0, 0.0, 31.0, 31.0],
         [32.0, 32.0, 63.0, 63.0],
         [16.0, 16.0, 47.0, 47.0]], jnp.float32)
    bidx = jnp.repeat(jnp.arange(b, dtype=jnp.float32), R_PER_IM)[:, None]
    rois_flat = jnp.concatenate([bidx, jnp.tile(boxes, (b, 1))], axis=1)   # (R, 5)
    rois = rois_flat.reshape(b, R_PER_IM, 5)

    # ---- subsample BEFORE the pointwise backbone (exact for a 1x1 conv) ----
    x_sub = im_data[:, :, ::STRIDE, ::STRIDE]                              # (B, 3, Hf, Wf)
    x_rows = jnp.transpose(x_sub, (0, 2, 3, 1)).reshape(b * HF * WF, CIN)  # (B*Hf*Wf, 3)

    # ---- fold pixel normalization into the one-shot backbone weights/bias ----
    # ((x+pm)/256 - mean)/std = a*x + b  ->  relu((a*x+b)@W) = relu(x@(diag(a)W) + b@W)
    a_ch = 1.0 / (256.0 * IMG_STD)
    b_ch = (PIXEL_MEANS / 256.0 - IMG_MEAN) / IMG_STD
    w_os_fold = a_ch[:, None] * params["w_base_os"]                        # (3, C_BASE)
    b_os_fold = (b_ch @ params["w_base_os"])[None, :]                      # (1, C_BASE)

    # ---- fused backbone (det + one-shot) ----
    feat_det_rows, feat_os_rows = pallas_backbone(
        x_rows, params["w_base_det"], w_os_fold, b_os_fold)                # (B*Hf*Wf, C_BASE)
    feat_det = feat_det_rows.reshape(b, HF, WF, C_BASE)                    # NHWC end-to-end
    feat_os = feat_os_rows.reshape(b, HF, WF, C_BASE)

    # ---- ROI pooling (nearest-neighbor gather glue) ----
    pooled_det = roi_pool_nearest_nhwc(feat_det, rois_flat, P, 1.0 / STRIDE)  # (R, P, P, C)
    pooled_os = roi_pool_nearest_nhwc(feat_os, rois_flat, P, 1.0 / STRIDE)
    p_det2d = pooled_det.reshape(b * R_PER_IM * S, C_BASE)                 # (R*S, C_BASE)
    p_os2d = pooled_os.reshape(b * R_PER_IM * S, C_BASE)

    # per-ROI spatial mean expressed as a (R, R*S) pooling matmul (done in-kernel)
    pool_mat = jnp.kron(jnp.eye(b * R_PER_IM, dtype=jnp.float32),
                        jnp.ones((1, S), jnp.float32)) / float(S)

    # ---- fused tail: head_to_tail + bbox_pred + Linear_top + dist/min/threshold ----
    bbox_pred, predict_labels, predict_not_background = pallas_tail(
        pool_mat, p_det2d, p_os2d,
        params["w_top_det"], params["w_top_os"],
        params["w_bbox"], params["b_bbox"],
        params["w_emb"], params["b_emb"],
        params["embeddings_obj"], THRESHOLD)

    bbox_pred = bbox_pred.reshape(b, R_PER_IM, -1)
    return predict_labels, predict_not_background, rois, bbox_pred


if __name__ == "__main__":
    root = jax.random.PRNGKey(0)
    k_im, k_params = jax.random.split(root)

    im_data = jax.random.uniform(k_im, (B, CIN, H, W), jnp.float32, -128.0, 128.0)
    im_info = jnp.array([[H, W, 1.0]] * B, jnp.float32)
    gt_boxes = jnp.zeros((B, 20, 5), jnp.float32)
    num_boxes = jnp.zeros((B,), jnp.int32)

    params = make_params(k_params)
    fwd = jax.jit(functools.partial(forward, params))
    labels, not_bg, rois, bbox_pred = fwd(im_data, im_info, gt_boxes, num_boxes)
    jax.block_until_ready((labels, not_bg, rois, bbox_pred))

    assert labels.shape == (B * R_PER_IM,)
    assert not_bg.shape == (B * R_PER_IM,)
    assert rois.shape == (B, R_PER_IM, 5)
    assert bbox_pred.shape == (B, R_PER_IM, 4)
    print("KERNEL_OK")
</pallas_src>

<mosaic_0001>
module attributes {stable_mosaic.version = 11 : i64} {
  func.func @backbone_kernel(%arg0: i32, %arg1: memref<16x3xf32, #tpu.memory_space<vmem>>, %arg2: memref<3x64xf32, #tpu.memory_space<vmem>>, %arg3: memref<3x64xf32, #tpu.memory_space<vmem>>, %arg4: memref<1x64xf32, #tpu.memory_space<vmem>>, %arg5: memref<16x64xf32, #tpu.memory_space<vmem>>, %arg6: memref<16x64xf32, #tpu.memory_space<vmem>>) attributes {dimension_semantics = [#tpu.dimension_semantics<parallel>], iteration_bounds = array<i64: 2>, scalar_prefetch = 0 : i64, scratch_operands = 0 : i64, tpu.core_type = #tpu.core_type<tc>, window_params = [{transform_indices = @transform_0, window_bounds = array<i64: 16, 3>}, {pipeline_mode = #tpu.pipeline_mode<synchronous>, transform_indices = @transform_1, window_bounds = array<i64: 3, 64>}, {pipeline_mode = #tpu.pipeline_mode<synchronous>, transform_indices = @transform_2, window_bounds = array<i64: 3, 64>}, {pipeline_mode = #tpu.pipeline_mode<synchronous>, transform_indices = @transform_3, window_bounds = array<i64: 1, 64>}, {transform_indices = @transform_4, window_bounds = array<i64: 16, 64>}, {transform_indices = @transform_5, window_bounds = array<i64: 16, 64>}]} {
    %c0 = arith.constant 0 : index
    %c0_0 = arith.constant 0 : index
    %0 = vector.load %arg1[%c0, %c0_0] : memref<16x3xf32, #tpu.memory_space<vmem>>, vector<16x3xf32>
    %c0_1 = arith.constant 0 : index
    %c0_2 = arith.constant 0 : index
    %1 = vector.load %arg2[%c0_1, %c0_2] : memref<3x64xf32, #tpu.memory_space<vmem>>, vector<3x64xf32>
    %c0_3 = arith.constant 0 : index
    %c0_4 = arith.constant 0 : index
    %2 = vector.load %arg3[%c0_3, %c0_4] : memref<3x64xf32, #tpu.memory_space<vmem>>, vector<3x64xf32>
    %3 = vector.extract_strided_slice %0 {offsets = [0, 0], sizes = [16, 1], strides = [1, 1]} : vector<16x3xf32> to vector<16x1xf32>
    %4 = vector.extract_strided_slice %1 {offsets = [0, 0], sizes = [1, 64], strides = [1, 1]} : vector<3x64xf32> to vector<1x64xf32>
    %5 = vector.broadcast %3 : vector<16x1xf32> to vector<16x64xf32>
    %6 = vector.broadcast %4 : vector<1x64xf32> to vector<16x64xf32>
    %7 = arith.mulf %5, %6 : vector<16x64xf32>
    %8 = vector.extract_strided_slice %0 {offsets = [0, 1], sizes = [16, 1], strides = [1, 1]} : vector<16x3xf32> to vector<16x1xf32>
    %9 = vector.extract_strided_slice %1 {offsets = [1, 0], sizes = [1, 64], strides = [1, 1]} : vector<3x64xf32> to vector<1x64xf32>
    %10 = vector.broadcast %8 : vector<16x1xf32> to vector<16x64xf32>
    %11 = vector.broadcast %9 : vector<1x64xf32> to vector<16x64xf32>
    %12 = arith.mulf %10, %11 : vector<16x64xf32>
    %13 = arith.addf %7, %12 : vector<16x64xf32>
    %14 = vector.extract_strided_slice %0 {offsets = [0, 2], sizes = [16, 1], strides = [1, 1]} : vector<16x3xf32> to vector<16x1xf32>
    %15 = vector.extract_strided_slice %1 {offsets = [2, 0], sizes = [1, 64], strides = [1, 1]} : vector<3x64xf32> to vector<1x64xf32>
    %16 = vector.broadcast %14 : vector<16x1xf32> to vector<16x64xf32>
    %17 = vector.broadcast %15 : vector<1x64xf32> to vector<16x64xf32>
    %18 = arith.mulf %16, %17 : vector<16x64xf32>
    %19 = arith.addf %13, %18 : vector<16x64xf32>
    %20 = vector.extract_strided_slice %0 {offsets = [0, 0], sizes = [16, 1], strides = [1, 1]} : vector<16x3xf32> to vector<16x1xf32>
    %21 = vector.extract_strided_slice %2 {offsets = [0, 0], sizes = [1, 64], strides = [1, 1]} : vector<3x64xf32> to vector<1x64xf32>
    %22 = vector.broadcast %20 : vector<16x1xf32> to vector<16x64xf32>
    %23 = vector.broadcast %21 : vector<1x64xf32> to vector<16x64xf32>
    %24 = arith.mulf %22, %23 : vector<16x64xf32>
    %25 = vector.extract_strided_slice %0 {offsets = [0, 1], sizes = [16, 1], strides = [1, 1]} : vector<16x3xf32> to vector<16x1xf32>
    %26 = vector.extract_strided_slice %2 {offsets = [1, 0], sizes = [1, 64], strides = [1, 1]} : vector<3x64xf32> to vector<1x64xf32>
    %27 = vector.broadcast %25 : vector<16x1xf32> to vector<16x64xf32>
    %28 = vector.broadcast %26 : vector<1x64xf32> to vector<16x64xf32>
    %29 = arith.mulf %27, %28 : vector<16x64xf32>
    %30 = arith.addf %24, %29 : vector<16x64xf32>
    %31 = vector.extract_strided_slice %0 {offsets = [0, 2], sizes = [16, 1], strides = [1, 1]} : vector<16x3xf32> to vector<16x1xf32>
    %32 = vector.extract_strided_slice %2 {offsets = [2, 0], sizes = [1, 64], strides = [1, 1]} : vector<3x64xf32> to vector<1x64xf32>
    %33 = vector.broadcast %31 : vector<16x1xf32> to vector<16x64xf32>
    %34 = vector.broadcast %32 : vector<1x64xf32> to vector<16x64xf32>
    %35 = arith.mulf %33, %34 : vector<16x64xf32>
    %36 = arith.addf %30, %35 : vector<16x64xf32>
    %c0_5 = arith.constant 0 : index
    %c0_6 = arith.constant 0 : index
    %37 = vector.load %arg4[%c0_5, %c0_6] : memref<1x64xf32, #tpu.memory_space<vmem>>, vector<1x64xf32>
    %38 = vector.broadcast %37 : vector<1x64xf32> to vector<16x64xf32>
    %39 = arith.addf %36, %38 : vector<16x64xf32>
    %cst = arith.constant 0.000000e+00 : f32
    %40 = vector.broadcast %cst : f32 to vector<16x64xf32>
    %41 = arith.maximumf %19, %40 : vector<16x64xf32>
    %c0_7 = arith.constant 0 : index
    %c0_8 = arith.constant 0 : index
    %42 = vector.load %arg5[%c0_7, %c0_8] : memref<16x64xf32, #tpu.memory_space<vmem>>, vector<16x64xf32>
    tpu.vector_store %arg5[%c0_7, %c0_8], %41 {strides = array<i32>} : memref<16x64xf32, #tpu.memory_space<vmem>>, vector<16x64xf32>,
    %cst_9 = arith.constant 0.000000e+00 : f32
    %43 = vector.broadcast %cst_9 : f32 to vector<16x64xf32>
    %44 = arith.maximumf %39, %43 : vector<16x64xf32>
    %c0_10 = arith.constant 0 : index
    %c0_11 = arith.constant 0 : index
    %45 = vector.load %arg6[%c0_10, %c0_11] : memref<16x64xf32, #tpu.memory_space<vmem>>, vector<16x64xf32>
    tpu.vector_store %arg6[%c0_10, %c0_11], %44 {strides = array<i32>} : memref<16x64xf32, #tpu.memory_space<vmem>>, vector<16x64xf32>,
    return
  }
  func.func @transform_0(%arg0: i32) -> (i32, i32) {
    %c0_i32 = arith.constant 0 : i32
    %c0_i32_0 = arith.constant 0 : i32
    return %arg0, %c0_i32 : i32, i32
  }
  func.func @transform_1(%arg0: i32) -> (i32, i32) {
    %c0_i32 = arith.constant 0 : i32
    %c0_i32_0 = arith.constant 0 : i32
    %c0_i32_1 = arith.constant 0 : i32
    return %c0_i32, %c0_i32_0 : i32, i32
  }
  func.func @transform_2(%arg0: i32) -> (i32, i32) {
    %c0_i32 = arith.constant 0 : i32
    %c0_i32_0 = arith.constant 0 : i32
    %c0_i32_1 = arith.constant 0 : i32
    return %c0_i32, %c0_i32_0 : i32, i32
  }
  func.func @transform_3(%arg0: i32) -> (i32, i32) {
    %c0_i32 = arith.constant 0 : i32
    %c0_i32_0 = arith.constant 0 : i32
    %c0_i32_1 = arith.constant 0 : i32
    return %c0_i32, %c0_i32_0 : i32, i32
  }
  func.func @transform_4(%arg0: i32) -> (i32, i32) {
    %c0_i32 = arith.constant 0 : i32
    %c0_i32_0 = arith.constant 0 : i32
    return %arg0, %c0_i32 : i32, i32
  }
  func.func @transform_5(%arg0: i32) -> (i32, i32) {
    %c0_i32 = arith.constant 0 : i32
    %c0_i32_0 = arith.constant 0 : i32
    return %arg0, %c0_i32 : i32, i32
  }
}

module attributes {stable_mosaic.version = 11 : i64} {
  func.func @tail_kernel(%arg0: memref<8x128xf32, #tpu.memory_space<vmem>>, %arg1: memref<128x64xf32, #tpu.memory_space<vmem>>, %arg2: memref<128x64xf32, #tpu.memory_space<vmem>>, %arg3: memref<64x128xf32, #tpu.memory_space<vmem>>, %arg4: memref<64x128xf32, #tpu.memory_space<vmem>>, %arg5: memref<128x4xf32, #tpu.memory_space<vmem>>, %arg6: memref<1x4xf32, #tpu.memory_space<vmem>>, %arg7: memref<128x32xf32, #tpu.memory_space<vmem>>, %arg8: memref<1x32xf32, #tpu.memory_space<vmem>>, %arg9: memref<32x8xf32, #tpu.memory_space<vmem>>, %arg10: memref<1x8xf32, #tpu.memory_space<vmem>>, %arg11: memref<8x4xf32, #tpu.memory_space<vmem>>, %arg12: memref<8x1xi32, #tpu.memory_space<vmem>>, %arg13: memref<8x1xi32, #tpu.memory_space<vmem>>) attributes {dimension_semantics = [], scalar_prefetch = 0 : i64, scratch_operands = 0 : i64, tpu.core_type = #tpu.core_type<tc>} {
    %c0 = arith.constant 0 : index
    %c0_0 = arith.constant 0 : index
    %0 = vector.load %arg0[%c0, %c0_0] : memref<8x128xf32, #tpu.memory_space<vmem>>, vector<8x128xf32>
    %c0_1 = arith.constant 0 : index
    %c0_2 = arith.constant 0 : index
    %1 = vector.load %arg1[%c0_1, %c0_2] : memref<128x64xf32, #tpu.memory_space<vmem>>, vector<128x64xf32>
    %cst = arith.constant dense<0.000000e+00> : vector<8x64xf32>
    %2 = tpu.matmul %0, %1, %cst {dimension_numbers = #tpu.dot_dimension_numbers<[1], [0], [0], [1], [0, 0, 1, 1], [], []>} : vector<8x128xf32>, vector<128x64xf32>, vector<8x64xf32> -> vector<8x64xf32>
    %c0_3 = arith.constant 0 : index
    %c0_4 = arith.constant 0 : index
    %3 = vector.load %arg2[%c0_3, %c0_4] : memref<128x64xf32, #tpu.memory_space<vmem>>, vector<128x64xf32>
    %cst_5 = arith.constant dense<0.000000e+00> : vector<8x64xf32>
    %4 = tpu.matmul %0, %3, %cst_5 {dimension_numbers = #tpu.dot_dimension_numbers<[1], [0], [0], [1], [0, 0, 1, 1], [], []>} : vector<8x128xf32>, vector<128x64xf32>, vector<8x64xf32> -> vector<8x64xf32>
    %c0_6 = arith.constant 0 : index
    %c0_7 = arith.constant 0 : index
    %5 = vector.load %arg3[%c0_6, %c0_7] : memref<64x128xf32, #tpu.memory_space<vmem>>, vector<64x128xf32>
    %cst_8 = arith.constant dense<0.000000e+00> : vector<8x128xf32>
    %6 = tpu.matmul %2, %5, %cst_8 {dimension_numbers = #tpu.dot_dimension_numbers<[1], [0], [0], [1], [0, 0, 1, 1], [], []>} : vector<8x64xf32>, vector<64x128xf32>, vector<8x128xf32> -> vector<8x128xf32>
    %c0_9 = arith.constant 0 : index
    %c0_10 = arith.constant 0 : index
    %7 = vector.load %arg4[%c0_9, %c0_10] : memref<64x128xf32, #tpu.memory_space<vmem>>, vector<64x128xf32>
    %cst_11 = arith.constant dense<0.000000e+00> : vector<8x128xf32>
    %8 = tpu.matmul %4, %7, %cst_11 {dimension_numbers = #tpu.dot_dimension_numbers<[1], [0], [0], [1], [0, 0, 1, 1], [], []>} : vector<8x64xf32>, vector<64x128xf32>, vector<8x128xf32> -> vector<8x128xf32>
    %c0_12 = arith.constant 0 : index
    %c0_13 = arith.constant 0 : index
    %9 = vector.load %arg5[%c0_12, %c0_13] : memref<128x4xf32, #tpu.memory_space<vmem>>, vector<128x4xf32>
    %cst_14 = arith.constant dense<0.000000e+00> : vector<8x4xf32>
    %10 = tpu.matmul %6, %9, %cst_14 {dimension_numbers = #tpu.dot_dimension_numbers<[1], [0], [0], [1], [0, 0, 1, 1], [], []>} : vector<8x128xf32>, vector<128x4xf32>, vector<8x4xf32> -> vector<8x4xf32>
    %c0_15 = arith.constant 0 : index
    %c0_16 = arith.constant 0 : index
    %11 = vector.load %arg6[%c0_15, %c0_16] : memref<1x4xf32, #tpu.memory_space<vmem>>, vector<1x4xf32>
    %12 = vector.broadcast %11 : vector<1x4xf32> to vector<8x4xf32>
    %13 = arith.addf %10, %12 : vector<8x4xf32>
    %c0_17 = arith.constant 0 : index
    %c0_18 = arith.constant 0 : index
    %14 = vector.load %arg11[%c0_17, %c0_18] : memref<8x4xf32, #tpu.memory_space<vmem>>, vector<8x4xf32>
    tpu.vector_store %arg11[%c0_17, %c0_18], %13 {strides = array<i32>} : memref<8x4xf32, #tpu.memory_space<vmem>>, vector<8x4xf32>,
    %c0_19 = arith.constant 0 : index
    %c0_20 = arith.constant 0 : index
    %15 = vector.load %arg7[%c0_19, %c0_20] : memref<128x32xf32, #tpu.memory_space<vmem>>, vector<128x32xf32>
    %cst_21 = arith.constant dense<0.000000e+00> : vector<8x32xf32>
    %16 = tpu.matmul %8, %15, %cst_21 {dimension_numbers = #tpu.dot_dimension_numbers<[1], [0], [0], [1], [0, 0, 1, 1], [], []>} : vector<8x128xf32>, vector<128x32xf32>, vector<8x32xf32> -> vector<8x32xf32>
    %c0_22 = arith.constant 0 : index
    %c0_23 = arith.constant 0 : index
    %17 = vector.load %arg8[%c0_22, %c0_23] : memref<1x32xf32, #tpu.memory_space<vmem>>, vector<1x32xf32>
    %18 = vector.broadcast %17 : vector<1x32xf32> to vector<8x32xf32>
    %19 = arith.addf %16, %18 : vector<8x32xf32>
    %20 = arith.mulf %19, %19 : vector<8x32xf32>
    %cst_24 = arith.constant dense<0.000000e+00> : vector<8xf32>
    %21 = vector.multi_reduction <add>, %20, %cst_24 [1] : vector<8x32xf32> to vector<8xf32>
    %22 = vector.shape_cast %21 : vector<8xf32> to vector<8x1xf32>
    %c0_25 = arith.constant 0 : index
    %c0_26 = arith.constant 0 : index
    %23 = vector.load %arg9[%c0_25, %c0_26] : memref<32x8xf32, #tpu.memory_space<vmem>>, vector<32x8xf32>
    %cst_27 = arith.constant dense<0.000000e+00> : vector<8x8xf32>
    %24 = tpu.matmul %19, %23, %cst_27 {dimension_numbers = #tpu.dot_dimension_numbers<[1], [0], [0], [1], [0, 0, 1, 1], [], []>} : vector<8x32xf32>, vector<32x8xf32>, vector<8x8xf32> -> vector<8x8xf32>
    %cst_28 = arith.constant 2.000000e+00 : f32
    %25 = vector.broadcast %cst_28 : f32 to vector<8x8xf32>
    %26 = arith.mulf %25, %24 : vector<8x8xf32>
    %27 = vector.broadcast %22 : vector<8x1xf32> to vector<8x8xf32>
    %28 = arith.subf %27, %26 : vector<8x8xf32>
    %c0_29 = arith.constant 0 : index
    %c0_30 = arith.constant 0 : index
    %29 = vector.load %arg10[%c0_29, %c0_30] : memref<1x8xf32, #tpu.memory_space<vmem>>, vector<1x8xf32>
    %30 = vector.broadcast %29 : vector<1x8xf32> to vector<8x8xf32>
    %31 = arith.addf %28, %30 : vector<8x8xf32>
    %cst_31 = arith.constant 0.000000e+00 : f32
    %32 = vector.broadcast %cst_31 : f32 to vector<8x8xf32>
    %33 = arith.maximumf %31, %32 : vector<8x8xf32>
    %cst_32 = arith.constant dense<0x7F800000> : vector<8xf32>
    %34 = vector.multi_reduction <minimumf>, %33, %cst_32 [1] : vector<8x8xf32> to vector<8xf32>
    %35 = vector.shape_cast %34 : vector<8xf32> to vector<8x1xf32>
    %36 = tpu.iota {dimensions = array<i32: 1>} : vector<8x8xi32>
    %37 = vector.broadcast %35 : vector<8x1xf32> to vector<8x8xf32>
    %38 = arith.cmpf ole, %33, %37 : vector<8x8xf32>
    %c8_i32 = arith.constant 8 : i32
    %39 = vector.broadcast %c8_i32 : i32 to vector<8x8xi32>
    %40 = arith.select %38, %36, %39 : vector<8x8xi1>, vector<8x8xi32>
    %cst_33 = arith.constant dense<2147483647> : vector<8xi32>
    %41 = vector.multi_reduction <minsi>, %40, %cst_33 [1] : vector<8x8xi32> to vector<8xi32>
    %42 = vector.shape_cast %41 : vector<8xi32> to vector<8x1xi32>
    %c0_34 = arith.constant 0 : index
    %c0_35 = arith.constant 0 : index
    %43 = vector.load %arg12[%c0_34, %c0_35] : memref<8x1xi32, #tpu.memory_space<vmem>>, vector<8x1xi32>
    tpu.vector_store %arg12[%c0_34, %c0_35], %42 {strides = array<i32>} : memref<8x1xi32, #tpu.memory_space<vmem>>, vector<8x1xi32>,
    %cst_36 = arith.constant 1.000000e+00 : f32
    %44 = vector.broadcast %cst_36 : f32 to vector<8x1xf32>
    %45 = arith.cmpf ole, %35, %44 : vector<8x1xf32>
    %46 = arith.extui %45 : vector<8x1xi1> to vector<8x1xi32>
    %c0_37 = arith.constant 0 : index
    %c0_38 = arith.constant 0 : index
    %47 = vector.load %arg13[%c0_37, %c0_38] : memref<8x1xi32, #tpu.memory_space<vmem>>, vector<8x1xi32>
    tpu.vector_store %arg13[%c0_37, %c0_38], %46 {strides = array<i32>} : memref<8x1xi32, #tpu.memory_space<vmem>>, vector<8x1xi32>,
    return
  }
}

</mosaic_0001>

<llo_original>
// kernel: forward.2
$region0: #{forward.2}
  #allocation0 [shape = 'u32[]', space=smem, size = 0x4, offset = 0x4, fixed_abs, tag = 'smem constant byte address 0x4 - core index']
  #allocation1 [shape = 'u32[144,128]{1,0:T(1,128)}', space=vmem, size = 0x12000, scoped, tag = 'internal scratch']
  %s0 = inlined_call_operand.vmem [shape: f32[32,3], index: 0, kind: input, shape index: {}]
  %s1 = inlined_call_operand.vmem [shape: f32[3,64], index: 1, kind: input, shape index: {}]
  %s2 = inlined_call_operand.vmem [shape: f32[3,64], index: 2, kind: input, shape index: {}]
  %s3 = inlined_call_operand.vmem [shape: f32[1,64], index: 3, kind: input, shape index: {}]
  %s4 = inlined_call_operand.vmem [shape: f32[32,64], index: 4, kind: output, shape index: {0}]
  %s5 = inlined_call_operand.vmem [shape: f32[32,64], index: 5, kind: output, shape index: {1}]
  %6 = xla_tuple %s4, %s5
  %s7 = sld [smem:[#allocation0]]
  $region57: #{forward.2} parent=0
    _
  %s9 = ssub.s32 1, %s7
  %s10 = scalar_select 0, %s9, %s7
  loop: start=0, step=1, limit=4
  $region2: #{forward.2} parent=0 // loop_pre_header
    _
  $region3: #{forward.2} parent=0 // loop_header
    %s12 = sphi 0, %s16
    %p13 = scmp.ge.s32.totalorder %s12, 4
    %s22 = sphi 0, %s24
    %s25 = sphi 0, %s22
    %s26 = sphi 0, %s25
    %s42 = sphi 0, %s26
    %s46 = sphi 0, %s46
    %s48 = sphi 0, %s46
    %s49 = sphi 0, %s48
    %s63 = sphi 0, %s49
    %s67 = sphi 0, %s67
    %s69 = sphi 0, %s67
    %s70 = sphi 0, %s69
    %s84 = sphi 0, %s70
    %s88 = sphi 0, %s88
    %s90 = sphi 0, %s88
    %s91 = sphi 0, %s90
    %s105 = sphi 0, %s91
    %s111 = sphi 0, %s113
    %s114 = sphi 0, %s111
    %s115 = sphi 0, %s114
    %s131 = sphi 0, %s115
    %s137 = sphi 0, %s139
    %s140 = sphi 0, %s137
    %s141 = sphi 0, %s140
    %s157 = sphi 0, %s141
  $region4: #{forward.2} parent=0 // loop_header_branch
    %15 = sbr.rel (%p13) target = $region8
  $region5: #{forward.2} parent=0 // loop_body
    %s17 = ssub.s32 %s12, 1
    %s18 = ssub.s32 %s12, 2
    %s19 = sadd.s32 %s12, 1
    %s20 = ssub.s32 %s12, %s19
    %p21 = scmp.eq.s32.totalorder %s20, 0
    %s23 = sadd.s32 %s22, 1
    %s24 = scalar_select %p21, %s22, %s23
    %p27 = pneg %p21
    %p28 = scmp.eq.s32.totalorder %s12, 1
    %p29 = por %p27, %p28
    %p30 = scmp.ne.s32.totalorder %s22, %s25
    %p31 = scmp.eq.s32.totalorder %s12, 0
    %p32 = por %p30, %p31
    %p33 = scmp.ne.s32.totalorder %s22, %s25
    %p34 = scmp.eq.s32.totalorder %s17, 1
    %p35 = por %p33, %p34
    %p36 = scmp.ne.s32.totalorder %s25, %s26
    %p37 = scmp.eq.s32.totalorder %s17, 0
    %p38 = por %p36, %p37
    %p39 = scmp.ne.s32.totalorder %s25, %s26
    %p40 = scmp.eq.s32.totalorder %s18, 1
    %p41 = por %p39, %p40
    %p43 = scmp.ne.s32.totalorder %s26, %s42
    %p44 = scmp.eq.s32.totalorder %s18, 0
    %p45 = por %p43, %p44
    %s47 = sadd.s32 %s46, 1
    %p50 = scmp.eq.s32.totalorder %s12, 1
    %p51 = scmp.ne.s32.totalorder %s46, %s48
    %p52 = scmp.eq.s32.totalorder %s12, 0
    %p53 = por %p51, %p52
    %p54 = scmp.ne.s32.totalorder %s46, %s48
    %p55 = scmp.eq.s32.totalorder %s17, 1
    %p56 = por %p54, %p55
    %p57 = scmp.ne.s32.totalorder %s48, %s49
    %p58 = scmp.eq.s32.totalorder %s17, 0
    %p59 = por %p57, %p58
    %p60 = scmp.ne.s32.totalorder %s48, %s49
    %p61 = scmp.eq.s32.totalorder %s18, 1
    %p62 = por %p60, %p61
    %p64 = scmp.ne.s32.totalorder %s49, %s63
    %p65 = scmp.eq.s32.totalorder %s18, 0
    %p66 = por %p64, %p65
    %s68 = sadd.s32 %s67, 1
    %p71 = scmp.eq.s32.totalorder %s12, 1
    %p72 = scmp.ne.s32.totalorder %s67, %s69
    %p73 = scmp.eq.s32.totalorder %s12, 0
    %p74 = por %p72, %p73
    %p75 = scmp.ne.s32.totalorder %s67, %s69
    %p76 = scmp.eq.s32.totalorder %s17, 1
    %p77 = por %p75, %p76
    %p78 = scmp.ne.s32.totalorder %s69, %s70
    %p79 = scmp.eq.s32.totalorder %s17, 0
    %p80 = por %p78, %p79
    %p81 = scmp.ne.s32.totalorder %s69, %s70
    %p82 = scmp.eq.s32.totalorder %s18, 1
    %p83 = por %p81, %p82
    %p85 = scmp.ne.s32.totalorder %s70, %s84
    %p86 = scmp.eq.s32.totalorder %s18, 0
    %p87 = por %p85, %p86
    %s89 = sadd.s32 %s88, 1
    %p92 = scmp.eq.s32.totalorder %s12, 1
    %p93 = scmp.ne.s32.totalorder %s88, %s90
    %p94 = scmp.eq.s32.totalorder %s12, 0
    %p95 = por %p93, %p94
    %p96 = scmp.ne.s32.totalorder %s88, %s90
    %p97 = scmp.eq.s32.totalorder %s17, 1
    %p98 = por %p96, %p97
    %p99 = scmp.ne.s32.totalorder %s90, %s91
    %p100 = scmp.eq.s32.totalorder %s17, 0
    %p101 = por %p99, %p100
    %p102 = scmp.ne.s32.totalorder %s90, %s91
    %p103 = scmp.eq.s32.totalorder %s18, 1
    %p104 = por %p102, %p103
    %p106 = scmp.ne.s32.totalorder %s91, %s105
    %p107 = scmp.eq.s32.totalorder %s18, 0
    %p108 = por %p106, %p107
    %s109 = ssub.s32 %s12, %s19
    %p110 = scmp.eq.s32.totalorder %s109, 0
    %s112 = sadd.s32 %s111, 1
    %s113 = scalar_select %p110, %s111, %s112
    %p116 = pneg %p110
    %p117 = scmp.eq.s32.totalorder %s12, 1
    %p118 = por %p116, %p117
    %p119 = scmp.ne.s32.totalorder %s111, %s114
    %p120 = scmp.eq.s32.totalorder %s12, 0
    %p121 = por %p119, %p120
    %p122 = scmp.ne.s32.totalorder %s111, %s114
    %p123 = scmp.eq.s32.totalorder %s17, 1
    %p124 = por %p122, %p123
    %p125 = scmp.ne.s32.totalorder %s114, %s115
    %p126 = scmp.eq.s32.totalorder %s17, 0
    %p127 = por %p125, %p126
    %p128 = scmp.ne.s32.totalorder %s114, %s115
    %p129 = scmp.eq.s32.totalorder %s18, 1
    %p130 = por %p128, %p129
    %p132 = scmp.ne.s32.totalorder %s115, %s131
    %p133 = scmp.eq.s32.totalorder %s18, 0
    %p134 = por %p132, %p133
    %s135 = ssub.s32 %s12, %s19
    %p136 = scmp.eq.s32.totalorder %s135, 0
    %s138 = sadd.s32 %s137, 1
    %s139 = scalar_select %p136, %s137, %s138
    %p142 = pneg %p136
    %p143 = scmp.eq.s32.totalorder %s12, 1
    %p144 = por %p142, %p143
    %p145 = scmp.ne.s32.totalorder %s137, %s140
    %p146 = scmp.eq.s32.totalorder %s12, 0
    %p147 = por %p145, %p146
    %p148 = scmp.ne.s32.totalorder %s137, %s140
    %p149 = scmp.eq.s32.totalorder %s17, 1
    %p150 = por %p148, %p149
    %p151 = scmp.ne.s32.totalorder %s140, %s141
    %p152 = scmp.eq.s32.totalorder %s17, 0
    %p153 = por %p151, %p152
    %p154 = scmp.ne.s32.totalorder %s140, %s141
    %p155 = scmp.eq.s32.totalorder %s18, 1
    %p156 = por %p154, %p155
    %p158 = scmp.ne.s32.totalorder %s141, %s157
    %p159 = scmp.eq.s32.totalorder %s18, 0
    %p160 = por %p158, %p159
    %p161 = scmp.le.s32.totalorder 1, %s12
    %p162 = scmp.lt.s32.totalorder %s12, 3
    %p163 = pnand %p161, %p162
    %p164 = pneg %p163
    // Predicated region
    $region9: #{forward.2} parent=5 // pred_check
      _
    $region10: #{forward.2} parent=5 // pred_check_branch
      %166 = sbr.rel (%p163) target = $region12
    $region11: #{forward.2} parent=5 // pred_region
      %s167 = ssub.s32 %s12, 1
      // Predicated region
      $region13: #{forward.2} parent=11 // pred_check
        %p168 = pneg %p59
      $region14: #{forward.2} parent=11 // pred_check_branch
        %170 = sbr.rel (%p168) target = $region16
      $region15: #{forward.2} parent=11 // pred_region
        _
      $region16: #{forward.2} parent=11 // pred_fallthru
        _
      // Predicated region
      $region17: #{forward.2} parent=11 // pred_check
        %p171 = pneg %p80
      $region18: #{forward.2} parent=11 // pred_check_branch
        %173 = sbr.rel (%p171) target = $region20
      $region19: #{forward.2} parent=11 // pred_region
        _
      $region20: #{forward.2} parent=11 // pred_fallthru
        _
      // Predicated region
      $region21: #{forward.2} parent=11 // pred_check
        %p174 = pneg %p101
      $region22: #{forward.2} parent=11 // pred_check_branch
        %176 = sbr.rel (%p174) target = $region24
      $region23: #{forward.2} parent=11 // pred_region
        _
      $region24: #{forward.2} parent=11 // pred_fallthru
        _
    $region12: #{forward.2} parent=5 // pred_fallthru
      _
    %p177 = scmp.lt.s32.totalorder %s12, 2
    // Predicated region
    $region25: #{forward.2} parent=5 // pred_check
      %p178 = pneg %p177
    $region26: #{forward.2} parent=5 // pred_check_branch
      %180 = sbr.rel (%p178) target = $region28
    $region27: #{forward.2} parent=5 // pred_region
      // Predicated region
      $region29: #{forward.2} parent=27 // pred_check
        %p181 = pneg %p32
      $region30: #{forward.2} parent=27 // pred_check_branch
        %183 = sbr.rel (%p181) target = $region32
      $region31: #{forward.2} parent=27 // pred_region
        %s184 = smul.u32 2, %s12
        %p185 = scmp.lt.s32.totalorder %s184, 3
        %s186 = scalar_select %p185, %s184, 3
        %s187 = smul.addr %s186, 8
        %s188 = scalar_lea.vmem %s0, %s187
        %s189 = smul.u32 2, %s12
      $region32: #{forward.2} parent=27 // pred_fallthru
        _
    $region28: #{forward.2} parent=5 // pred_fallthru
      _
    %p190 = scmp.le.s32.totalorder 1, %s12
    %p191 = scmp.lt.s32.totalorder %s12, 3
    %p192 = pnand %p190, %p191
    %p193 = pneg %p192
    // Predicated region
    $region33: #{forward.2} parent=5 // pred_check
      _
    $region34: #{forward.2} parent=5 // pred_check_branch
      %195 = sbr.rel (%p192) target = $region36
    $region35: #{forward.2} parent=5 // pred_region
      %s196 = ssub.s32 %s12, 1
      %s197 = smul.u32 2, %s17
      %p198 = scmp.lt.s32.totalorder %s197, 3
      %s199 = scalar_select %p198, %s197, 3
      %s200 = smul.addr %s199, 8
      %s201 = scalar_lea.vmem %s0, %s200
      %p202 = pneg %p38
      %p203 = pneg %p35
      %p204 = pneg %p59
      %p205 = pneg %p56
      %p206 = pneg %p80
      %p207 = pneg %p77
      %p208 = pneg %p101
      %p209 = pneg %p98
      %p210 = pneg %p127
      %p211 = pneg %p124
      %s212 = smul.u32 2, %s17
      %p213 = scmp.lt.s32.totalorder %s212, 3
      %s214 = scalar_select %p213, %s212, 3
      %s215 = smul.addr %s214, 8
      %s216 = scalar_lea.vmem %s4, %s215
      %p217 = pneg %p153
      %p218 = pneg %p150
      %s219 = smul.u32 2, %s17
      %p220 = scmp.lt.s32.totalorder %s219, 3
      %s221 = scalar_select %p220, %s219, 3
      %s222 = smul.addr %s221, 8
      %s223 = scalar_lea.vmem %s5, %s222
      %s224 = smul.u32 2, %s17
      %p225 = scmp.lt.s32.totalorder %s224, 3
      %s226 = scalar_select %p225, %s224, 3
      %s227 = smul.addr %s226, 8
      %s228 = scalar_lea.vmem %s0, %s227
      %s229 = smul.u32 2, %s17
      %s230 = smul.u32 2, %s17
      %p231 = scmp.lt.s32.totalorder %s230, 3
      %s232 = scalar_select %p231, %s230, 3
      %s233 = smul.addr %s232, 8
      %s234 = scalar_lea.vmem %s4, %s233
      %s235 = smul.u32 2, %s17
      %s236 = smul.u32 2, %s17
      %p237 = scmp.lt.s32.totalorder %s236, 3
      %s238 = scalar_select %p237, %s236, 3
      %s239 = smul.addr %s238, 8
      %s240 = scalar_lea.vmem %s5, %s239
      %s241 = smul.u32 2, %s17
      %v242 = vld [vmem:[%s228] sm:$0xff]
      %v243 = vld [vmem:[%s228 + $0x8] sm:$0xff]
      %v244 = vld [vmem:[%s1] sm:$0x7]
      %v245 = vld [vmem:[%s2] sm:$0x7]
      %247 = vset.pattern.permute.xlu0 0
      %248 = vperm.xlu0 %247, %v242
      %v249 = vpop.permute.xlu0 %248
      %252 = vset.pattern.permute.xlu0 0
      %253 = vperm.xlu0 %252, %v243
      %v254 = vpop.permute.xlu0 %253
      %v256 = vlaneseq
      %v257 = vshrl.u32 %v256, 7
      %v258 = vsub.s32 0, %v257
      %v259 = vrot.slane %v244, %v258
      %v260 = vmul.f32 %v249, %v259
      %v261 = vmul.f32 %v254, %v259
      %262 = vset.pattern.permute.xlu0 1
      %263 = vperm.xlu0 %262, %v242
      %v264 = vpop.permute.xlu0 %263
      %266 = vset.pattern.permute.xlu0 1
      %267 = vperm.xlu0 %266, %v243
      %v268 = vpop.permute.xlu0 %267
      %v270 = vlaneseq
      %v271 = vshrl.u32 %v270, 7
      %v272 = vsub.s32 1, %v271
      %v273 = vrot.slane %v244, %v272
      %v274 = vmul.f32 %v264, %v273
      %v275 = vmul.f32 %v268, %v273
      %v276 = vadd.f32 %v260, %v274
      %v277 = vadd.f32 %v261, %v275
      %278 = vset.pattern.permute.xlu0 2
      %279 = vperm.xlu0 %278, %v242
      %v280 = vpop.permute.xlu0 %279
      %282 = vset.pattern.permute.xlu0 2
      %283 = vperm.xlu0 %282, %v243
      %v284 = vpop.permute.xlu0 %283
      %v286 = vlaneseq
      %v287 = vshrl.u32 %v286, 7
      %v288 = vsub.s32 2, %v287
      %v289 = vrot.slane %v244, %v288
      %v290 = vmul.f32 %v280, %v289
      %v291 = vmul.f32 %v284, %v289
      %v292 = vadd.f32 %v276, %v290
      %v293 = vadd.f32 %v277, %v291
      %v294 = vlaneseq
      %v295 = vshrl.u32 %v294, 7
      %v296 = vsub.s32 0, %v295
      %v297 = vrot.slane %v245, %v296
      %v298 = vmul.f32 %v249, %v297
      %v299 = vmul.f32 %v254, %v297
      %v300 = vlaneseq
      %v301 = vshrl.u32 %v300, 7
      %v302 = vsub.s32 1, %v301
      %v303 = vrot.slane %v245, %v302
      %v304 = vmul.f32 %v264, %v303
      %v305 = vmul.f32 %v268, %v303
      %v306 = vadd.f32 %v298, %v304
      %v307 = vadd.f32 %v299, %v305
      %v308 = vlaneseq
      %v309 = vshrl.u32 %v308, 7
      %v310 = vsub.s32 2, %v309
      %v311 = vrot.slane %v245, %v310
      %v312 = vmul.f32 %v280, %v311
      %v313 = vmul.f32 %v284, %v311
      %v314 = vadd.f32 %v306, %v312
      %v315 = vadd.f32 %v307, %v313
      %v316 = vld [vmem:[%s3] sm:$0x1]
      %v318 = vlaneseq
      %v319 = vshrl.u32 %v318, 7
      %v320 = vsub.s32 0, %v319
      %v321 = vrot.slane %v316, %v320
      %v323 = vadd.f32 %v314, %v321
      %v324 = vadd.f32 %v315, %v321
      %v325 = vmax.f32 %v292, 0.0
      %v326 = vmax.f32 %v293, 0.0
      %vm327 = vcmask 523264
      %328 = vst.msk [vmem:[%s234] sm:$0xff] %vm327, %v325
      %329 = vst.msk [vmem:[%s234 + $0x8] sm:$0xff] %vm327, %v326
      %v330 = vmax.f32 %v323, 0.0
      %v331 = vmax.f32 %v324, 0.0
      %332 = vst.msk [vmem:[%s240] sm:$0xff] %vm327, %v330
      %333 = vst.msk [vmem:[%s240 + $0x8] sm:$0xff] %vm327, %v331
      %s334 = smul.u32 2, %s17
      %p335 = scmp.lt.s32.totalorder %s334, 3
      %s336 = scalar_select %p335, %s334, 3
      %s337 = smul.addr %s336, 8
      %s338 = scalar_lea.vmem %s4, %s337
      %s339 = smul.u32 2, %s17
      %p340 = scmp.lt.s32.totalorder %s339, 3
      %s341 = scalar_select %p340, %s339, 3
      %s342 = smul.addr %s341, 8
      %s343 = scalar_lea.vmem %s5, %s342
      // Predicated region
      $region37: #{forward.2} parent=35 // pred_check
        %p344 = pneg %p124
      $region38: #{forward.2} parent=35 // pred_check_branch
        %346 = sbr.rel (%p344) target = $region40
      $region39: #{forward.2} parent=35 // pred_region
        %s347 = smul.u32 2, %s17
      $region40: #{forward.2} parent=35 // pred_fallthru
        _
      // Predicated region
      $region41: #{forward.2} parent=35 // pred_check
        %p348 = pneg %p150
      $region42: #{forward.2} parent=35 // pred_check_branch
        %350 = sbr.rel (%p348) target = $region44
      $region43: #{forward.2} parent=35 // pred_region
        %s351 = smul.u32 2, %s17
      $region44: #{forward.2} parent=35 // pred_fallthru
        _
    $region36: #{forward.2} parent=5 // pred_fallthru
      _
    %p352 = scmp.le.s32.totalorder 2, %s12
    // Predicated region
    $region45: #{forward.2} parent=5 // pred_check
      %p353 = pneg %p352
    $region46: #{forward.2} parent=5 // pred_check_branch
      %355 = sbr.rel (%p353) target = $region48
    $region47: #{forward.2} parent=5 // pred_region
      %s356 = ssub.s32 %s12, 2
      // Predicated region
      $region49: #{forward.2} parent=47 // pred_check
        %p357 = pneg %p130
      $region50: #{forward.2} parent=47 // pred_check_branch
        %359 = sbr.rel (%p357) target = $region52
      $region51: #{forward.2} parent=47 // pred_region
        %s360 = smul.u32 2, %s18
        %p361 = scmp.lt.s32.totalorder %s360, 3
        %s362 = scalar_select %p361, %s360, 3
        %s363 = smul.addr %s362, 8
        %s364 = scalar_lea.vmem %s4, %s363
      $region52: #{forward.2} parent=47 // pred_fallthru
        _
      // Predicated region
      $region53: #{forward.2} parent=47 // pred_check
        %p365 = pneg %p156
      $region54: #{forward.2} parent=47 // pred_check_branch
        %367 = sbr.rel (%p365) target = $region56
      $region55: #{forward.2} parent=47 // pred_region
        %s368 = smul.u32 2, %s18
        %p369 = scmp.lt.s32.totalorder %s368, 3
        %s370 = scalar_select %p369, %s368, 3
        %s371 = smul.addr %s370, 8
        %s372 = scalar_lea.vmem %s5, %s371
      $region56: #{forward.2} parent=47 // pred_fallthru
        _
    $region48: #{forward.2} parent=5 // pred_fallthru
      _
  $region6: #{forward.2} parent=0 // loop_footer
    %s16 = sadd.s32 1, %s12
  $region7: #{forward.2} parent=0 // loop_footer_branch
    %11 = sbr.rel target = $region3
  $region8: #{forward.2} parent=0 // loop_exit
    _

// kernel: forward.3
$region0: #{forward.3}
  #allocation0 [shape = 'u32[]', space=smem, size = 0x4, offset = 0x4, fixed_abs, tag = 'smem constant byte address 0x4 - core index']
  #allocation1 [shape = 'u32[144,128]{1,0:T(1,128)}', space=vmem, size = 0x12000, scoped, tag = 'internal scratch']
  %s0 = inlined_call_operand.vmem [shape: f32[8,128], index: 0, kind: input, shape index: {}]
  %s1 = inlined_call_operand.vmem [shape: f32[128,64], index: 1, kind: input, shape index: {}]
  %s2 = inlined_call_operand.vmem [shape: f32[128,64], index: 2, kind: input, shape index: {}]
  %s3 = inlined_call_operand.vmem [shape: f32[64,128], index: 3, kind: input, shape index: {}]
  %s4 = inlined_call_operand.vmem [shape: f32[64,128], index: 4, kind: input, shape index: {}]
  %s5 = inlined_call_operand.vmem [shape: f32[128,4], index: 5, kind: input, shape index: {}]
  %s6 = inlined_call_operand.vmem [shape: f32[1,4], index: 6, kind: input, shape index: {}]
  %s7 = inlined_call_operand.vmem [shape: f32[128,32], index: 7, kind: input, shape index: {}]
  %s8 = inlined_call_operand.vmem [shape: f32[1,32], index: 8, kind: input, shape index: {}]
  %s9 = inlined_call_operand.vmem [shape: f32[32,8], index: 9, kind: input, shape index: {}]
  %s10 = inlined_call_operand.vmem [shape: f32[1,8], index: 10, kind: input, shape index: {}]
  %s11 = inlined_call_operand.hbm [shape: f32[8,4], index: 11, kind: output, shape index: {0}]
  %s12 = inlined_call_operand.vmem [shape: s32[8,1], index: 12, kind: output, shape index: {1}]
  %s13 = inlined_call_operand.vmem [shape: s32[8,1], index: 13, kind: output, shape index: {2}]
  %14 = xla_tuple %s11, %s12, %s13
  %s15 = sld [smem:[#allocation0]]
  $region70: #{forward.3} parent=0
    _
  %s17 = ssub.s32 1, %s15
  %s18 = scalar_select 0, %s17, %s15
  $region1: #{forward.3} parent=0
    #allocation2 [shape = 'u8[4096]{0}', space=vmem, size = 0x1000, scoped, tag = 'output window, operand 0, single buffered']
    #allocation3 [shape = 's32[1]{0}', space=sflag, size = 0x4, scoped, tag = 'scoped memory for forward.3']
    %19 = vsyncpa [#allocation3], 0
    // Predicated region
    $region2: #{forward.3} parent=1 // pred_check
      _
    $region3: #{forward.3} parent=1 // pred_check_branch
      %21 = sbr.rel (0) target = $region5
    $region4: #{forward.3} parent=1 // pred_region
      _
    $region5: #{forward.3} parent=1 // pred_fallthru
      _
    // Predicated region
    $region6: #{forward.3} parent=1 // pred_check
      _
    $region7: #{forward.3} parent=1 // pred_check_branch
      %23 = sbr.rel (0) target = $region9
    $region8: #{forward.3} parent=1 // pred_region
      _
    $region9: #{forward.3} parent=1 // pred_fallthru
      _
    // Predicated region
    $region10: #{forward.3} parent=1 // pred_check
      _
    $region11: #{forward.3} parent=1 // pred_check_branch
      %25 = sbr.rel (0) target = $region13
    $region12: #{forward.3} parent=1 // pred_region
      _
    $region13: #{forward.3} parent=1 // pred_fallthru
      _
    // Predicated region
    $region14: #{forward.3} parent=1 // pred_check
      _
    $region15: #{forward.3} parent=1 // pred_check_branch
      %27 = sbr.rel (0) target = $region17
    $region16: #{forward.3} parent=1 // pred_region
      _
    $region17: #{forward.3} parent=1 // pred_fallthru
      _
    // Predicated region
    $region18: #{forward.3} parent=1 // pred_check
      _
    $region19: #{forward.3} parent=1 // pred_check_branch
      %29 = sbr.rel (0) target = $region21
    $region20: #{forward.3} parent=1 // pred_region
      _
    $region21: #{forward.3} parent=1 // pred_fallthru
      _
    // Predicated region
    $region22: #{forward.3} parent=1 // pred_check
      _
    $region23: #{forward.3} parent=1 // pred_check_branch
      %31 = sbr.rel (0) target = $region25
    $region24: #{forward.3} parent=1 // pred_region
      _
    $region25: #{forward.3} parent=1 // pred_fallthru
      _
    // Predicated region
    $region26: #{forward.3} parent=1 // pred_check
      _
    $region27: #{forward.3} parent=1 // pred_check_branch
      %33 = sbr.rel (0) target = $region29
    $region28: #{forward.3} parent=1 // pred_region
      _
    $region29: #{forward.3} parent=1 // pred_fallthru
      _
    // Predicated region
    $region30: #{forward.3} parent=1 // pred_check
      _
    $region31: #{forward.3} parent=1 // pred_check_branch
      %35 = sbr.rel (0) target = $region33
    $region32: #{forward.3} parent=1 // pred_region
      _
    $region33: #{forward.3} parent=1 // pred_fallthru
      _
    // Predicated region
    $region34: #{forward.3} parent=1 // pred_check
      _
    $region35: #{forward.3} parent=1 // pred_check_branch
      %37 = sbr.rel (0) target = $region37
    $region36: #{forward.3} parent=1 // pred_region
      _
    $region37: #{forward.3} parent=1 // pred_fallthru
      _
    // Predicated region
    $region38: #{forward.3} parent=1 // pred_check
      _
    $region39: #{forward.3} parent=1 // pred_check_branch
      %39 = sbr.rel (0) target = $region41
    $region40: #{forward.3} parent=1 // pred_region
      _
    $region41: #{forward.3} parent=1 // pred_fallthru
      _
    // Predicated region
    $region42: #{forward.3} parent=1 // pred_check
      _
    $region43: #{forward.3} parent=1 // pred_check_branch
      %41 = sbr.rel (0) target = $region45
    $region44: #{forward.3} parent=1 // pred_region
      _
    $region45: #{forward.3} parent=1 // pred_fallthru
      _
    %v42 = vld [vmem:[%s0] sm:$0xff]
    %v43 = vld [vmem:[%s1] sm:$0xff]
    %v44 = vld [vmem:[%s1 + $0x8] sm:$0xff]
    %v45 = vld [vmem:[%s1 + $0x10] sm:$0xff]
    %v46 = vld [vmem:[%s1 + $0x18] sm:$0xff]
    %v47 = vld [vmem:[%s1 + $0x20] sm:$0xff]
    %v48 = vld [vmem:[%s1 + $0x28] sm:$0xff]
    %v49 = vld [vmem:[%s1 + $0x30] sm:$0xff]
    %v50 = vld [vmem:[%s1 + $0x38] sm:$0xff]
    %v51 = vld [vmem:[%s1 + $0x40] sm:$0xff]
    %v52 = vld [vmem:[%s1 + $0x48] sm:$0xff]
    %v53 = vld [vmem:[%s1 + $0x50] sm:$0xff]
    %v54 = vld [vmem:[%s1 + $0x58] sm:$0xff]
    %v55 = vld [vmem:[%s1 + $0x60] sm:$0xff]
    %v56 = vld [vmem:[%s1 + $0x68] sm:$0xff]
    %v57 = vld [vmem:[%s1 + $0x70] sm:$0xff]
    %v58 = vld [vmem:[%s1 + $0x78] sm:$0xff]
    %59 = vmatprep.subr.mxu0 0.0
    %60 = vmatpush1.msra.mxu0 %v43
    %61 = vmatprep.subr.mxu0 0.0
    %62 = vmatpush1.msra.mxu0 %v44
    %63 = vmatprep.subr.mxu0 0.0
    %64 = vmatpush1.msra.mxu0 %v45
    %65 = vmatprep.subr.mxu0 0.0
    %66 = vmatpush1.msra.mxu0 %v46
    %67 = vmatprep.subr.mxu0 0.0
    %68 = vmatpush1.msra.mxu0 %v47
    %69 = vmatprep.subr.mxu0 0.0
    %70 = vmatpush1.msra.mxu0 %v48
    %71 = vmatprep.subr.mxu0 0.0
    %72 = vmatpush1.msra.mxu0 %v49
    %73 = vmatprep.subr.mxu0 0.0
    %74 = vmatpush1.msra.mxu0 %v50
    %75 = vmatprep.subr.mxu0 0.0
    %76 = vmatpush1.msra.mxu0 %v51
    %77 = vmatprep.subr.mxu0 0.0
    %78 = vmatpush1.msra.mxu0 %v52
    %79 = vmatprep.subr.mxu0 0.0
    %80 = vmatpush1.msra.mxu0 %v53
    %81 = vmatprep.subr.mxu0 0.0
    %82 = vmatpush1.msra.mxu0 %v54
    %83 = vmatprep.subr.mxu0 0.0
    %84 = vmatpush1.msra.mxu0 %v55
    %85 = vmatprep.subr.mxu0 0.0
    %86 = vmatpush1.msra.mxu0 %v56
    %87 = vmatprep.subr.mxu0 0.0
    %88 = vmatpush1.msra.mxu0 %v57
    %89 = vmatprep.subr.mxu0 0.0
    %90 = vmatpush1.msra.mxu0 %v58
    %91 = vmatprep.subr.mxu0 0.0
    %92 = vmatpush1.msra.mxu0 0.0
    %93 = vmatprep.subr.mxu0 0.0
    %94 = vmatpush1.msra.mxu0 0.0
    %95 = vmatprep.subr.mxu0 0.0
    %96 = vmatpush1.msra.mxu0 0.0
    %97 = vmatprep.subr.mxu0 0.0
    %98 = vmatpush1.msra.mxu0 0.0
    %99 = vmatprep.subr.mxu0 0.0
    %100 = vmatpush1.msra.mxu0 0.0
    %101 = vmatprep.subr.mxu0 0.0
    %102 = vmatpush1.msra.mxu0 0.0
    %103 = vmatprep.subr.mxu0 0.0
    %104 = vmatpush1.msra.mxu0 0.0
    %105 = vmatprep.subr.mxu0 0.0
    %106 = vmatpush1.msra.mxu0 0.0
    %107 = vmatprep.subr.mxu0 0.0
    %108 = vmatpush1.msra.mxu0 0.0
    %109 = vmatprep.subr.mxu0 0.0
    %110 = vmatpush1.msra.mxu0 0.0
    %111 = vmatprep.subr.mxu0 0.0
    %112 = vmatpush1.msra.mxu0 0.0
    %113 = vmatprep.subr.mxu0 0.0
    %114 = vmatpush1.msra.mxu0 0.0
    %115 = vmatprep.subr.mxu0 0.0
    %116 = vmatpush1.msra.mxu0 0.0
    %117 = vmatprep.subr.mxu0 0.0
    %118 = vmatpush1.msra.mxu0 0.0
    %119 = vmatprep.subr.mxu0 0.0
    %120 = vmatpush1.msra.mxu0 0.0
    %121 = vmatprep.subr.mxu0 0.0
    %122 = vmatpush1.msra.mxu0 0.0
    %123 = vmatprep.mubr.f32.mxu0 0.0
    %124 = vmatmul.mubr.f32.gmra.mrb[0].mxu0 %v42
    %v125 = vpop.f32.mrb[0].mxu0
    %v126 = vadd.f32 0.0, %v125
    %v127 = vpop.f32.mrb[0].mxu0
    %128 = vdwg.mxu0
    %v129 = vld [vmem:[%s2] sm:$0xff]
    %v130 = vld [vmem:[%s2 + $0x8] sm:$0xff]
    %v131 = vld [vmem:[%s2 + $0x10] sm:$0xff]
    %v132 = vld [vmem:[%s2 + $0x18] sm:$0xff]
    %v133 = vld [vmem:[%s2 + $0x20] sm:$0xff]
    %v134 = vld [vmem:[%s2 + $0x28] sm:$0xff]
    %v135 = vld [vmem:[%s2 + $0x30] sm:$0xff]
    %v136 = vld [vmem:[%s2 + $0x38] sm:$0xff]
    %v137 = vld [vmem:[%s2 + $0x40] sm:$0xff]
    %v138 = vld [vmem:[%s2 + $0x48] sm:$0xff]
    %v139 = vld [vmem:[%s2 + $0x50] sm:$0xff]
    %v140 = vld [vmem:[%s2 + $0x58] sm:$0xff]
    %v141 = vld [vmem:[%s2 + $0x60] sm:$0xff]
    %v142 = vld [vmem:[%s2 + $0x68] sm:$0xff]
    %v143 = vld [vmem:[%s2 + $0x70] sm:$0xff]
    %v144 = vld [vmem:[%s2 + $0x78] sm:$0xff]
    %145 = vmatprep.subr.mxu0 0.0
    %146 = vmatpush1.msra.mxu0 %v129
    %147 = vmatprep.subr.mxu0 0.0
    %148 = vmatpush1.msra.mxu0 %v130
    %149 = vmatprep.subr.mxu0 0.0
    %150 = vmatpush1.msra.mxu0 %v131
    %151 = vmatprep.subr.mxu0 0.0
    %152 = vmatpush1.msra.mxu0 %v132
    %153 = vmatprep.subr.mxu0 0.0
    %154 = vmatpush1.msra.mxu0 %v133
    %155 = vmatprep.subr.mxu0 0.0
    %156 = vmatpush1.msra.mxu0 %v134
    %157 = vmatprep.subr.mxu0 0.0
    %158 = vmatpush1.msra.mxu0 %v135
    %159 = vmatprep.subr.mxu0 0.0
    %160 = vmatpush1.msra.mxu0 %v136
    %161 = vmatprep.subr.mxu0 0.0
    %162 = vmatpush1.msra.mxu0 %v137
    %163 = vmatprep.subr.mxu0 0.0
    %164 = vmatpush1.msra.mxu0 %v138
    %165 = vmatprep.subr.mxu0 0.0
    %166 = vmatpush1.msra.mxu0 %v139
    %167 = vmatprep.subr.mxu0 0.0
    %168 = vmatpush1.msra.mxu0 %v140
    %169 = vmatprep.subr.mxu0 0.0
    %170 = vmatpush1.msra.mxu0 %v141
    %171 = vmatprep.subr.mxu0 0.0
    %172 = vmatpush1.msra.mxu0 %v142
    %173 = vmatprep.subr.mxu0 0.0
    %174 = vmatpush1.msra.mxu0 %v143
    %175 = vmatprep.subr.mxu0 0.0
    %176 = vmatpush1.msra.mxu0 %v144
    %177 = vmatprep.subr.mxu0 0.0
    %178 = vmatpush1.msra.mxu0 0.0
    %179 = vmatprep.subr.mxu0 0.0
    %180 = vmatpush1.msra.mxu0 0.0
    %181 = vmatprep.subr.mxu0 0.0
    %182 = vmatpush1.msra.mxu0 0.0
    %183 = vmatprep.subr.mxu0 0.0
    %184 = vmatpush1.msra.mxu0 0.0
    %185 = vmatprep.subr.mxu0 0.0
    %186 = vmatpush1.msra.mxu0 0.0
    %187 = vmatprep.subr.mxu0 0.0
    %188 = vmatpush1.msra.mxu0 0.0
    %189 = vmatprep.subr.mxu0 0.0
    %190 = vmatpush1.msra.mxu0 0.0
    %191 = vmatprep.subr.mxu0 0.0
    %192 = vmatpush1.msra.mxu0 0.0
    %193 = vmatprep.subr.mxu0 0.0
    %194 = vmatpush1.msra.mxu0 0.0
    %195 = vmatprep.subr.mxu0 0.0
    %196 = vmatpush1.msra.mxu0 0.0
    %197 = vmatprep.subr.mxu0 0.0
    %198 = vmatpush1.msra.mxu0 0.0
    %199 = vmatprep.subr.mxu0 0.0
    %200 = vmatpush1.msra.mxu0 0.0
    %201 = vmatprep.subr.mxu0 0.0
    %202 = vmatpush1.msra.mxu0 0.0
    %203 = vmatprep.subr.mxu0 0.0
    %204 = vmatpush1.msra.mxu0 0.0
    %205 = vmatprep.subr.mxu0 0.0
    %206 = vmatpush1.msra.mxu0 0.0
    %207 = vmatprep.subr.mxu0 0.0
    %208 = vmatpush1.msra.mxu0 0.0
    %209 = vmatprep.mubr.f32.mxu0 0.0
    %210 = vmatmul.mubr.f32.gmra.mrb[0].mxu0 %v42
    %v211 = vpop.f32.mrb[0].mxu0
    %v212 = vadd.f32 0.0, %v211
    %v213 = vpop.f32.mrb[0].mxu0
    %214 = vdwg.mxu0
    %v215 = vld [vmem:[%s3] sm:$0xff]
    %v216 = vld [vmem:[%s3 + $0x8] sm:$0xff]
    %v217 = vld [vmem:[%s3 + $0x10] sm:$0xff]
    %v218 = vld [vmem:[%s3 + $0x18] sm:$0xff]
    %v219 = vld [vmem:[%s3 + $0x20] sm:$0xff]
    %v220 = vld [vmem:[%s3 + $0x28] sm:$0xff]
    %v221 = vld [vmem:[%s3 + $0x30] sm:$0xff]
    %v222 = vld [vmem:[%s3 + $0x38] sm:$0xff]
    %vm223 = vcmask 523264
    %v225 = vsel %vm223, %v126, 0
    %227 = vmatprep.subr.mxu0 0.0
    %228 = vmatpush1.msra.mxu0 %v215
    %229 = vmatprep.subr.mxu0 0.0
    %230 = vmatpush1.msra.mxu0 %v216
    %231 = vmatprep.subr.mxu0 0.0
    %232 = vmatpush1.msra.mxu0 %v217
    %233 = vmatprep.subr.mxu0 0.0
    %234 = vmatpush1.msra.mxu0 %v218
    %235 = vmatprep.subr.mxu0 0.0
    %236 = vmatpush1.msra.mxu0 %v219
    %237 = vmatprep.subr.mxu0 0.0
    %238 = vmatpush1.msra.mxu0 %v220
    %239 = vmatprep.subr.mxu0 0.0
    %240 = vmatpush1.msra.mxu0 %v221
    %241 = vmatprep.subr.mxu0 0.0
    %242 = vmatpush1.msra.mxu0 %v222
    %243 = vmatprep.subr.mxu0 0.0
    %244 = vmatpush1.msra.mxu0 0.0
    %245 = vmatprep.subr.mxu0 0.0
    %246 = vmatpush1.msra.mxu0 0.0
    %247 = vmatprep.subr.mxu0 0.0
    %248 = vmatpush1.msra.mxu0 0.0
    %249 = vmatprep.subr.mxu0 0.0
    %250 = vmatpush1.msra.mxu0 0.0
    %251 = vmatprep.subr.mxu0 0.0
    %252 = vmatpush1.msra.mxu0 0.0
    %253 = vmatprep.subr.mxu0 0.0
    %254 = vmatpush1.msra.mxu0 0.0
    %255 = vmatprep.subr.mxu0 0.0
    %256 = vmatpush1.msra.mxu0 0.0
    %257 = vmatprep.subr.mxu0 0.0
    %258 = vmatpush1.msra.mxu0 0.0
    %259 = vmatprep.subr.mxu0 0.0
    %260 = vmatpush1.msra.mxu0 0.0
    %261 = vmatprep.subr.mxu0 0.0
    %262 = vmatpush1.msra.mxu0 0.0
    %263 = vmatprep.subr.mxu0 0.0
    %264 = vmatpush1.msra.mxu0 0.0
    %265 = vmatprep.subr.mxu0 0.0
    %266 = vmatpush1.msra.mxu0 0.0
    %267 = vmatprep.subr.mxu0 0.0
    %268 = vmatpush1.msra.mxu0 0.0
    %269 = vmatprep.subr.mxu0 0.0
    %270 = vmatpush1.msra.mxu0 0.0
    %271 = vmatprep.subr.mxu0 0.0
    %272 = vmatpush1.msra.mxu0 0.0
    %273 = vmatprep.subr.mxu0 0.0
    %274 = vmatpush1.msra.mxu0 0.0
    %275 = vmatprep.subr.mxu0 0.0
    %276 = vmatpush1.msra.mxu0 0.0
    %277 = vmatprep.subr.mxu0 0.0
    %278 = vmatpush1.msra.mxu0 0.0
    %279 = vmatprep.subr.mxu0 0.0
    %280 = vmatpush1.msra.mxu0 0.0
    %281 = vmatprep.subr.mxu0 0.0
    %282 = vmatpush1.msra.mxu0 0.0
    %283 = vmatprep.subr.mxu0 0.0
    %284 = vmatpush1.msra.mxu0 0.0
    %285 = vmatprep.subr.mxu0 0.0
    %286 = vmatpush1.msra.mxu0 0.0
    %287 = vmatprep.subr.mxu0 0.0
    %288 = vmatpush1.msra.mxu0 0.0
    %289 = vmatprep.subr.mxu0 0.0
    %290 = vmatpush1.msra.mxu0 0.0
    %291 = vmatprep.mubr.f32.mxu0 0.0
    %292 = vmatmul.mubr.f32.gmra.mrb[0].mxu0 %v225
    %v293 = vpop.f32.mrb[0].mxu0
    %v294 = vadd.f32 0.0, %v293
    %v295 = vpop.f32.mrb[0].mxu0
    %296 = vdwg.mxu0
    %v297 = vld [vmem:[%s4] sm:$0xff]
    %v298 = vld [vmem:[%s4 + $0x8] sm:$0xff]
    %v299 = vld [vmem:[%s4 + $0x10] sm:$0xff]
    %v300 = vld [vmem:[%s4 + $0x18] sm:$0xff]
    %v301 = vld [vmem:[%s4 + $0x20] sm:$0xff]
    %v302 = vld [vmem:[%s4 + $0x28] sm:$0xff]
    %v303 = vld [vmem:[%s4 + $0x30] sm:$0xff]
    %v304 = vld [vmem:[%s4 + $0x38] sm:$0xff]
    %v306 = vsel %vm223, %v212, 0
    %308 = vmatprep.subr.mxu0 0.0
    %309 = vmatpush1.msra.mxu0 %v297
    %310 = vmatprep.subr.mxu0 0.0
    %311 = vmatpush1.msra.mxu0 %v298
    %312 = vmatprep.subr.mxu0 0.0
    %313 = vmatpush1.msra.mxu0 %v299
    %314 = vmatprep.subr.mxu0 0.0
    %315 = vmatpush1.msra.mxu0 %v300
    %316 = vmatprep.subr.mxu0 0.0
    %317 = vmatpush1.msra.mxu0 %v301
    %318 = vmatprep.subr.mxu0 0.0
    %319 = vmatpush1.msra.mxu0 %v302
    %320 = vmatprep.subr.mxu0 0.0
    %321 = vmatpush1.msra.mxu0 %v303
    %322 = vmatprep.subr.mxu0 0.0
    %323 = vmatpush1.msra.mxu0 %v304
    %324 = vmatprep.subr.mxu0 0.0
    %325 = vmatpush1.msra.mxu0 0.0
    %326 = vmatprep.subr.mxu0 0.0
    %327 = vmatpush1.msra.mxu0 0.0
    %328 = vmatprep.subr.mxu0 0.0
    %329 = vmatpush1.msra.mxu0 0.0
    %330 = vmatprep.subr.mxu0 0.0
    %331 = vmatpush1.msra.mxu0 0.0
    %332 = vmatprep.subr.mxu0 0.0
    %333 = vmatpush1.msra.mxu0 0.0
    %334 = vmatprep.subr.mxu0 0.0
    %335 = vmatpush1.msra.mxu0 0.0
    %336 = vmatprep.subr.mxu0 0.0
    %337 = vmatpush1.msra.mxu0 0.0
    %338 = vmatprep.subr.mxu0 0.0
    %339 = vmatpush1.msra.mxu0 0.0
    %340 = vmatprep.subr.mxu0 0.0
    %341 = vmatpush1.msra.mxu0 0.0
    %342 = vmatprep.subr.mxu0 0.0
    %343 = vmatpush1.msra.mxu0 0.0
    %344 = vmatprep.subr.mxu0 0.0
    %345 = vmatpush1.msra.mxu0 0.0
    %346 = vmatprep.subr.mxu0 0.0
    %347 = vmatpush1.msra.mxu0 0.0
    %348 = vmatprep.subr.mxu0 0.0
    %349 = vmatpush1.msra.mxu0 0.0
    %350 = vmatprep.subr.mxu0 0.0
    %351 = vmatpush1.msra.mxu0 0.0
    %352 = vmatprep.subr.mxu0 0.0
    %353 = vmatpush1.msra.mxu0 0.0
    %354 = vmatprep.subr.mxu0 0.0
    %355 = vmatpush1.msra.mxu0 0.0
    %356 = vmatprep.subr.mxu0 0.0
    %357 = vmatpush1.msra.mxu0 0.0
    %358 = vmatprep.subr.mxu0 0.0
    %359 = vmatpush1.msra.mxu0 0.0
    %360 = vmatprep.subr.mxu0 0.0
    %361 = vmatpush1.msra.mxu0 0.0
    %362 = vmatprep.subr.mxu0 0.0
    %363 = vmatpush1.msra.mxu0 0.0
    %364 = vmatprep.subr.mxu0 0.0
    %365 = vmatpush1.msra.mxu0 0.0
    %366 = vmatprep.subr.mxu0 0.0
    %367 = vmatpush1.msra.mxu0 0.0
    %368 = vmatprep.subr.mxu0 0.0
    %369 = vmatpush1.msra.mxu0 0.0
    %370 = vmatprep.subr.mxu0 0.0
    %371 = vmatpush1.msra.mxu0 0.0
    %372 = vmatprep.mubr.f32.mxu0 0.0
    %373 = vmatmul.mubr.f32.gmra.mrb[0].mxu0 %v306
    %v374 = vpop.f32.mrb[0].mxu0
    %v375 = vadd.f32 0.0, %v374
    %v376 = vpop.f32.mrb[0].mxu0
    %377 = vdwg.mxu0
    %v378 = vld [vmem:[%s5] sm:$0xff]
    %v379 = vld [vmem:[%s5 + $0x8] sm:$0xff]
    %v380 = vld [vmem:[%s5 + $0x10] sm:$0xff]
    %v381 = vld [vmem:[%s5 + $0x18] sm:$0xff]
    %v382 = vld [vmem:[%s5 + $0x20] sm:$0xff]
    %v383 = vld [vmem:[%s5 + $0x28] sm:$0xff]
    %v384 = vld [vmem:[%s5 + $0x30] sm:$0xff]
    %v385 = vld [vmem:[%s5 + $0x38] sm:$0xff]
    %v386 = vld [vmem:[%s5 + $0x40] sm:$0xff]
    %v387 = vld [vmem:[%s5 + $0x48] sm:$0xff]
    %v388 = vld [vmem:[%s5 + $0x50] sm:$0xff]
    %v389 = vld [vmem:[%s5 + $0x58] sm:$0xff]
    %v390 = vld [vmem:[%s5 + $0x60] sm:$0xff]
    %v391 = vld [vmem:[%s5 + $0x68] sm:$0xff]
    %v392 = vld [vmem:[%s5 + $0x70] sm:$0xff]
    %v393 = vld [vmem:[%s5 + $0x78] sm:$0xff]
    %v394 = vld [vmem:[%s6] sm:$0x1]
    %v396 = vlaneseq
    %v397 = vshrl.u32 %v396, 7
    %v398 = vsub.s32 0, %v397
    %v399 = vrot.slane %v394, %v398
    %401 = vmatprep.subr.mxu0 0.0
    %402 = vmatpush1.msra.mxu0 %v378
    %403 = vmatprep.subr.mxu0 0.0
    %404 = vmatpush1.msra.mxu0 %v379
    %405 = vmatprep.subr.mxu0 0.0
    %406 = vmatpush1.msra.mxu0 %v380
    %407 = vmatprep.subr.mxu0 0.0
    %408 = vmatpush1.msra.mxu0 %v381
    %409 = vmatprep.subr.mxu0 0.0
    %410 = vmatpush1.msra.mxu0 %v382
    %411 = vmatprep.subr.mxu0 0.0
    %412 = vmatpush1.msra.mxu0 %v383
    %413 = vmatprep.subr.mxu0 0.0
    %414 = vmatpush1.msra.mxu0 %v384
    %415 = vmatprep.subr.mxu0 0.0
    %416 = vmatpush1.msra.mxu0 %v385
    %417 = vmatprep.subr.mxu0 0.0
    %418 = vmatpush1.msra.mxu0 %v386
    %419 = vmatprep.subr.mxu0 0.0
    %420 = vmatpush1.msra.mxu0 %v387
    %421 = vmatprep.subr.mxu0 0.0
    %422 = vmatpush1.msra.mxu0 %v388
    %423 = vmatprep.subr.mxu0 0.0
    %424 = vmatpush1.msra.mxu0 %v389
    %425 = vmatprep.subr.mxu0 0.0
    %426 = vmatpush1.msra.mxu0 %v390
    %427 = vmatprep.subr.mxu0 0.0
    %428 = vmatpush1.msra.mxu0 %v391
    %429 = vmatprep.subr.mxu0 0.0
    %430 = vmatpush1.msra.mxu0 %v392
    %431 = vmatprep.subr.mxu0 0.0
    %432 = vmatpush1.msra.mxu0 %v393
    %433 = vmatprep.subr.mxu0 0.0
    %434 = vmatpush1.msra.mxu0 0.0
    %435 = vmatprep.subr.mxu0 0.0
    %436 = vmatpush1.msra.mxu0 0.0
    %437 = vmatprep.subr.mxu0 0.0
    %438 = vmatpush1.msra.mxu0 0.0
    %439 = vmatprep.subr.mxu0 0.0
    %440 = vmatpush1.msra.mxu0 0.0
    %441 = vmatprep.subr.mxu0 0.0
    %442 = vmatpush1.msra.mxu0 0.0
    %443 = vmatprep.subr.mxu0 0.0
    %444 = vmatpush1.msra.mxu0 0.0
    %445 = vmatprep.subr.mxu0 0.0
    %446 = vmatpush1.msra.mxu0 0.0
    %447 = vmatprep.subr.mxu0 0.0
    %448 = vmatpush1.msra.mxu0 0.0
    %449 = vmatprep.subr.mxu0 0.0
    %450 = vmatpush1.msra.mxu0 0.0
    %451 = vmatprep.subr.mxu0 0.0
    %452 = vmatpush1.msra.mxu0 0.0
    %453 = vmatprep.subr.mxu0 0.0
    %454 = vmatpush1.msra.mxu0 0.0
    %455 = vmatprep.subr.mxu0 0.0
    %456 = vmatpush1.msra.mxu0 0.0
    %457 = vmatprep.subr.mxu0 0.0
    %458 = vmatpush1.msra.mxu0 0.0
    %459 = vmatprep.subr.mxu0 0.0
    %460 = vmatpush1.msra.mxu0 0.0
    %461 = vmatprep.subr.mxu0 0.0
    %462 = vmatpush1.msra.mxu0 0.0
    %463 = vmatprep.subr.mxu0 0.0
    %464 = vmatpush1.msra.mxu0 0.0
    %465 = vmatprep.mubr.f32.mxu0 0.0
    %466 = vmatmul.mubr.f32.gmra.mrb[0].mxu0 %v294
    %v467 = vpop.f32.mrb[0].mxu0
    %v468 = vadd.f32 %v399, %v467
    %v469 = vpop.f32.mrb[0].mxu0
    %470 = vdwg.mxu0
    %vm471 = vcmask 31744
    %472 = vst.msk [vmem:[#allocation2] sm:$0xff] %vm471, %v468
    %v473 = vld [vmem:[%s7] sm:$0xff]
    %v474 = vld [vmem:[%s7 + $0x8] sm:$0xff]
    %v475 = vld [vmem:[%s7 + $0x10] sm:$0xff]
    %v476 = vld [vmem:[%s7 + $0x18] sm:$0xff]
    %v477 = vld [vmem:[%s7 + $0x20] sm:$0xff]
    %v478 = vld [vmem:[%s7 + $0x28] sm:$0xff]
    %v479 = vld [vmem:[%s7 + $0x30] sm:$0xff]
    %v480 = vld [vmem:[%s7 + $0x38] sm:$0xff]
    %v481 = vld [vmem:[%s7 + $0x40] sm:$0xff]
    %v482 = vld [vmem:[%s7 + $0x48] sm:$0xff]
    %v483 = vld [vmem:[%s7 + $0x50] sm:$0xff]
    %v484 = vld [vmem:[%s7 + $0x58] sm:$0xff]
    %v485 = vld [vmem:[%s7 + $0x60] sm:$0xff]
    %v486 = vld [vmem:[%s7 + $0x68] sm:$0xff]
    %v487 = vld [vmem:[%s7 + $0x70] sm:$0xff]
    %v488 = vld [vmem:[%s7 + $0x78] sm:$0xff]
    %v489 = vld [vmem:[%s8] sm:$0x1]
    %v491 = vlaneseq
    %v492 = vshrl.u32 %v491, 7
    %v493 = vsub.s32 0, %v492
    %v494 = vrot.slane %v489, %v493
    %496 = vmatprep.subr.mxu0 0.0
    %497 = vmatpush1.msra.mxu0 %v473
    %498 = vmatprep.subr.mxu0 0.0
    %499 = vmatpush1.msra.mxu0 %v474
    %500 = vmatprep.subr.mxu0 0.0
    %501 = vmatpush1.msra.mxu0 %v475
    %502 = vmatprep.subr.mxu0 0.0
    %503 = vmatpush1.msra.mxu0 %v476
    %504 = vmatprep.subr.mxu0 0.0
    %505 = vmatpush1.msra.mxu0 %v477
    %506 = vmatprep.subr.mxu0 0.0
    %507 = vmatpush1.msra.mxu0 %v478
    %508 = vmatprep.subr.mxu0 0.0
    %509 = vmatpush1.msra.mxu0 %v479
    %510 = vmatprep.subr.mxu0 0.0
    %511 = vmatpush1.msra.mxu0 %v480
    %512 = vmatprep.subr.mxu0 0.0
    %513 = vmatpush1.msra.mxu0 %v481
    %514 = vmatprep.subr.mxu0 0.0
    %515 = vmatpush1.msra.mxu0 %v482
    %516 = vmatprep.subr.mxu0 0.0
    %517 = vmatpush1.msra.mxu0 %v483
    %518 = vmatprep.subr.mxu0 0.0
    %519 = vmatpush1.msra.mxu0 %v484
    %520 = vmatprep.subr.mxu0 0.0
    %521 = vmatpush1.msra.mxu0 %v485
    %522 = vmatprep.subr.mxu0 0.0
    %523 = vmatpush1.msra.mxu0 %v486
    %524 = vmatprep.subr.mxu0 0.0
    %525 = vmatpush1.msra.mxu0 %v487
    %526 = vmatprep.subr.mxu0 0.0
    %527 = vmatpush1.msra.mxu0 %v488
    %528 = vmatprep.subr.mxu0 0.0
    %529 = vmatpush1.msra.mxu0 0.0
    %530 = vmatprep.subr.mxu0 0.0
    %531 = vmatpush1.msra.mxu0 0.0
    %532 = vmatprep.subr.mxu0 0.0
    %533 = vmatpush1.msra.mxu0 0.0
    %534 = vmatprep.subr.mxu0 0.0
    %535 = vmatpush1.msra.mxu0 0.0
    %536 = vmatprep.subr.mxu0 0.0
    %537 = vmatpush1.msra.mxu0 0.0
    %538 = vmatprep.subr.mxu0 0.0
    %539 = vmatpush1.msra.mxu0 0.0
    %540 = vmatprep.subr.mxu0 0.0
    %541 = vmatpush1.msra.mxu0 0.0
    %542 = vmatprep.subr.mxu0 0.0
    %543 = vmatpush1.msra.mxu0 0.0
    %544 = vmatprep.subr.mxu0 0.0
    %545 = vmatpush1.msra.mxu0 0.0
    %546 = vmatprep.subr.mxu0 0.0
    %547 = vmatpush1.msra.mxu0 0.0
    %548 = vmatprep.subr.mxu0 0.0
    %549 = vmatpush1.msra.mxu0 0.0
    %550 = vmatprep.subr.mxu0 0.0
    %551 = vmatpush1.msra.mxu0 0.0
    %552 = vmatprep.subr.mxu0 0.0
    %553 = vmatpush1.msra.mxu0 0.0
    %554 = vmatprep.subr.mxu0 0.0
    %555 = vmatpush1.msra.mxu0 0.0
    %556 = vmatprep.subr.mxu0 0.0
    %557 = vmatpush1.msra.mxu0 0.0
    %558 = vmatprep.subr.mxu0 0.0
    %559 = vmatpush1.msra.mxu0 0.0
    %560 = vmatprep.mubr.f32.mxu0 0.0
    %561 = vmatmul.mubr.f32.gmra.mrb[0].mxu0 %v375
    %v562 = vpop.f32.mrb[0].mxu0
    %v563 = vadd.f32 %v494, %v562
    %v564 = vpop.f32.mrb[0].mxu0
    %565 = vdwg.mxu0
    %v566 = vmul.f32 %v563, %v563
    %vm567 = vcmask 261120
    %v568 = vsel %vm567, %v566, 0.0
    %569 = vadd.xlane.f32.xlu0 %v568
    %v570 = vpop.xlane.xlu0 %569
    %v571 = vld [vmem:[%s9] sm:$0xff]
    %v572 = vld [vmem:[%s9 + $0x8] sm:$0xff]
    %v573 = vld [vmem:[%s9 + $0x10] sm:$0xff]
    %v574 = vld [vmem:[%s9 + $0x18] sm:$0xff]
    %v576 = vsel %vm567, %v563, 0
    %578 = vmatprep.subr.mxu0 0.0
    %579 = vmatpush1.msra.mxu0 %v571
    %580 = vmatprep.subr.mxu0 0.0
    %581 = vmatpush1.msra.mxu0 %v572
    %582 = vmatprep.subr.mxu0 0.0
    %583 = vmatpush1.msra.mxu0 %v573
    %584 = vmatprep.subr.mxu0 0.0
    %585 = vmatpush1.msra.mxu0 %v574
    %586 = vmatprep.subr.mxu0 0.0
    %587 = vmatpush1.msra.mxu0 0.0
    %588 = vmatprep.subr.mxu0 0.0
    %589 = vmatpush1.msra.mxu0 0.0
    %590 = vmatprep.subr.mxu0 0.0
    %591 = vmatpush1.msra.mxu0 0.0
    %592 = vmatprep.subr.mxu0 0.0
    %593 = vmatpush1.msra.mxu0 0.0
    %594 = vmatprep.subr.mxu0 0.0
    %595 = vmatpush1.msra.mxu0 0.0
    %596 = vmatprep.subr.mxu0 0.0
    %597 = vmatpush1.msra.mxu0 0.0
    %598 = vmatprep.subr.mxu0 0.0
    %599 = vmatpush1.msra.mxu0 0.0
    %600 = vmatprep.subr.mxu0 0.0
    %601 = vmatpush1.msra.mxu0 0.0
    %602 = vmatprep.subr.mxu0 0.0
    %603 = vmatpush1.msra.mxu0 0.0
    %604 = vmatprep.subr.mxu0 0.0
    %605 = vmatpush1.msra.mxu0 0.0
    %606 = vmatprep.subr.mxu0 0.0
    %607 = vmatpush1.msra.mxu0 0.0
    %608 = vmatprep.subr.mxu0 0.0
    %609 = vmatpush1.msra.mxu0 0.0
    %610 = vmatprep.subr.mxu0 0.0
    %611 = vmatpush1.msra.mxu0 0.0
    %612 = vmatprep.subr.mxu0 0.0
    %613 = vmatpush1.msra.mxu0 0.0
    %614 = vmatprep.subr.mxu0 0.0
    %615 = vmatpush1.msra.mxu0 0.0
    %616 = vmatprep.subr.mxu0 0.0
    %617 = vmatpush1.msra.mxu0 0.0
    %618 = vmatprep.subr.mxu0 0.0
    %619 = vmatpush1.msra.mxu0 0.0
    %620 = vmatprep.subr.mxu0 0.0
    %621 = vmatpush1.msra.mxu0 0.0
    %622 = vmatprep.subr.mxu0 0.0
    %623 = vmatpush1.msra.mxu0 0.0
    %624 = vmatprep.subr.mxu0 0.0
    %625 = vmatpush1.msra.mxu0 0.0
    %626 = vmatprep.subr.mxu0 0.0
    %627 = vmatpush1.msra.mxu0 0.0
    %628 = vmatprep.subr.mxu0 0.0
    %629 = vmatpush1.msra.mxu0 0.0
    %630 = vmatprep.subr.mxu0 0.0
    %631 = vmatpush1.msra.mxu0 0.0
    %632 = vmatprep.subr.mxu0 0.0
    %633 = vmatpush1.msra.mxu0 0.0
    %634 = vmatprep.subr.mxu0 0.0
    %635 = vmatpush1.msra.mxu0 0.0
    %636 = vmatprep.subr.mxu0 0.0
    %637 = vmatpush1.msra.mxu0 0.0
    %638 = vmatprep.subr.mxu0 0.0
    %639 = vmatpush1.msra.mxu0 0.0
    %640 = vmatprep.subr.mxu0 0.0
    %641 = vmatpush1.msra.mxu0 0.0
    %642 = vmatprep.mubr.f32.mxu0 0.0
    %643 = vmatmul.mubr.f32.gmra.mrb[0].mxu0 %v576
    %v644 = vpop.f32.mrb[0].mxu0
    %v645 = vadd.f32 0.0, %v644
    %v646 = vpop.f32.mrb[0].mxu0
    %647 = vdwg.mxu0
    %v648 = vmul.f32 %v645, 2.0
    %v649 = vsub.f32 %v570, %v648
    %v650 = vld [vmem:[%s10] sm:$0x1]
    %v652 = vlaneseq
    %v653 = vshrl.u32 %v652, 7
    %v654 = vsub.s32 0, %v653
    %v655 = vrot.slane %v650, %v654
    %v657 = vadd.f32 %v649, %v655
    %v658 = vmax.f32 %v657, 0.0
    %vm659 = vcmask 64512
    %v660 = vsel %vm659, %v658, inf
    %661 = vmin.xlane.f32.xlu0 %v660
    %v662 = vpop.xlane.xlu0 %661
    %v663 = vlaneseq
    %v664 = vand.u32 %v663, 127
    %vm665 = vcmp.le.f32.partialorder %v658, %v662
    %v666 = vsel %vm665, %v664, 8
    %v667 = vsel %vm659, %v666, 2147483647
    %v668 = vand.u32 %v667, 65535
    %v669 = vshra.s32 %v667, 16
    %v670 = vcvt.s32.f32 %v668
    %v671 = vcvt.s32.f32 %v669
    %672 = vmin.xlane.f32.xlu0 %v671
    %v673 = vpop.xlane.xlu0 %672
    %vm674 = vcmp.eq.f32.partialorder %v671, %v673
    %v675 = vsel %vm674, %v670, inf
    %676 = vmin.xlane.f32.xlu0 %v675
    %v677 = vpop.xlane.xlu0 %676
    %v678 = vcvt.f32.s32 %v677
    %v679 = vcvt.f32.s32 %v673
    %v680 = vshll.u32 %v679, 16
    %v681 = vadd.s32 %v680, %v678
    %vm682 = vcmask 7168
    %683 = vst.msk [vmem:[%s12] sm:$0xff] %vm682, %v681
    %vm684 = vcmp.le.f32.partialorder %v662, 1.0
    %v685 = vsel %vm684, 1, 0
    %686 = vst.msk [vmem:[%s13] sm:$0xff] %vm682, %v685
    // Predicated region
    $region46: #{forward.3} parent=1 // pred_check
      _
    $region47: #{forward.3} parent=1 // pred_check_branch
      %688 = sbr.rel (0) target = $region49
    $region48: #{forward.3} parent=1 // pred_region
      %s690 = ssub.s32 128, 128
      %691 = vsyncadd [#allocation3], %s690
      %s693 = sshll.u32 [#allocation2], 4
      %s694 = int_to_ptr.vmem [resolvable:$true] %s693
      %696 = dma.vmem_to_hbm [thread:$0]  %s694, 128, %s11, [#allocation3]
    $region49: #{forward.3} parent=1 // pred_fallthru
      _
    // Predicated region
    $region50: #{forward.3} parent=1 // pred_check
      _
    $region51: #{forward.3} parent=1 // pred_check_branch
      %698 = sbr.rel (0) target = $region53
    $region52: #{forward.3} parent=1 // pred_region
      _
    $region53: #{forward.3} parent=1 // pred_fallthru
      _
    // Predicated region
    $region54: #{forward.3} parent=1 // pred_check
      _
    $region55: #{forward.3} parent=1 // pred_check_branch
      %700 = sbr.rel (0) target = $region57
    $region56: #{forward.3} parent=1 // pred_region
      _
    $region57: #{forward.3} parent=1 // pred_fallthru
      _
    // Predicated region
    $region58: #{forward.3} parent=1 // pred_check
      _
    $region59: #{forward.3} parent=1 // pred_check_branch
      %702 = sbr.rel (0) target = $region61
    $region60: #{forward.3} parent=1 // pred_region
      %703 = dma.done [#allocation3], 128
    $region61: #{forward.3} parent=1 // pred_fallthru
      _
    // Predicated region
    $region62: #{forward.3} parent=1 // pred_check
      _
    $region63: #{forward.3} parent=1 // pred_check_branch
      %705 = sbr.rel (0) target = $region65
    $region64: #{forward.3} parent=1 // pred_region
      _
    $region65: #{forward.3} parent=1 // pred_fallthru
      _
    // Predicated region
    $region66: #{forward.3} parent=1 // pred_check
      _
    $region67: #{forward.3} parent=1 // pred_check_branch
      %707 = sbr.rel (0) target = $region69
    $region68: #{forward.3} parent=1 // pred_region
      _
    $region69: #{forward.3} parent=1 // pred_fallthru
      _
    %708 = vsyncpa [#allocation3], 1

</llo_original>
